<compile_context>
chip_gen: v5e
topology: v5e:2x2
jax: 0.10.0
libtpu: 0.0.40
codegen_flags: <defaults>
</compile_context>

<pallas_src>
import functools

import jax
import jax.numpy as jnp
from jax.experimental import pallas as pl
from jax.experimental.pallas import tpu as pltpu


EPS = 1e-3


def _bn_kernel(x_ref, gamma_ref, beta_ref, o_ref, *, bf16_apply):
    # x_ref / o_ref: (N, TC, HW)   gamma_ref / beta_ref: (1, TC, 1)
    x = x_ref[...]
    xf = x if x.dtype == jnp.float32 else x.astype(jnp.float32)
    n, _, hw = xf.shape
    inv_m = 1.0 / (n * hw)

    # Per-channel batch statistics over (N, H*W); the block spans the full
    # N and HW extents, so stats are complete within one grid step.
    s = jnp.sum(xf, axis=(0, 2), keepdims=True)                 # (1, TC, 1)
    mean = s * inv_m
    d = xf - mean
    # Two-pass biased variance: sum((x - mean)^2) / M (no cancellation).
    var = jnp.sum(d * d, axis=(0, 2), keepdims=True) * inv_m    # (1, TC, 1)

    gamma = gamma_ref[...]
    beta = beta_ref[...]
    gamma = gamma if gamma.dtype == jnp.float32 else gamma.astype(jnp.float32)
    beta = beta if beta.dtype == jnp.float32 else beta.astype(jnp.float32)

    # Fold the affine into per-channel scale/bias: y = x*scale + bias.
    scale = gamma * jax.lax.rsqrt(var + EPS)                    # (1, TC, 1)
    bias = beta - mean * scale                                  # (1, TC, 1)

    if bf16_apply and x.dtype == jnp.bfloat16:
        # Stats stay in f32; elementwise apply + store in native bf16
        # (v6e / v7x VPUs execute bf16 natively).
        y = x * scale.astype(jnp.bfloat16) + bias.astype(jnp.bfloat16)
    else:
        y = xf * scale + bias
    o_ref[...] = y.astype(o_ref.dtype)


def _device_kind():
    try:
        return jax.devices()[0].device_kind.lower()
    except Exception:  # pragma: no cover - defensive
        return ""


def _pick_channel_tile(c, n, hw, n_cores, in_itemsize, out_itemsize):
    """Largest legal channel tile whose block fits a conservative VMEM budget.

    Candidates (largest / best first):
      * c // n_cores  (exactly one block per TensorCore on v7x)
      * c             (single grid step on 1-TC chips)
      * smaller divisors of c (multiples of 8) as VMEM-pressure fallbacks.
    """
    budget = 12 << 20  # stays under the v5e 16 MiB default scoped VMEM limit
    # double-buffered input + output blocks, plus f32 working temporaries
    per_channel_bytes = n * hw * (2 * in_itemsize + 2 * out_itemsize + 8)

    candidates = []
    if n_cores > 1 and c % n_cores == 0 and (c // n_cores) % 8 == 0:
        candidates.append(c // n_cores)
    candidates.append(c)
    for t in (512, 384, 320, 256, 192, 128, 64, 32, 16, 8):
        if t < c and c % t == 0 and t % 8 == 0:
            candidates.append(t)

    seen = set()
    ordered = []
    for t in candidates:
        if t not in seen:
            seen.add(t)
            ordered.append(t)

    for t in ordered:
        if per_channel_bytes * t <= budget:
            return t
    return ordered[-1]


def batchnorm2d(x_nchw, gamma, beta):
    """Training-mode BatchNorm2d forward. x_nchw: (N,C,H,W); gamma/beta: (C,)."""
    N, C, H, W = x_nchw.shape
    HW = H * W

    # Free reshapes of the contiguous NCHW layout — no transposes, one kernel.
    x3 = x_nchw.reshape(N, C, HW)
    g3 = gamma.reshape(1, C, 1)
    b3 = beta.reshape(1, C, 1)

    kind = _device_kind()
    n_cores = 2 if "v7" in kind else 1              # v7x: 2 TensorCores/chip
    bf16_apply = ("v6" in kind) or ("v7" in kind)   # native bf16 VPU

    in_isz = jnp.dtype(x_nchw.dtype).itemsize
    tc = _pick_channel_tile(C, N, HW, n_cores, in_isz, in_isz)
    grid = (C // tc,)

    total = N * C * HW
    cost = pl.CostEstimate(
        flops=8 * total,                 # sub, sq, reduce adds, apply mul/add
        transcendentals=C,               # one rsqrt per channel
        bytes_accessed=2 * total * in_isz + 2 * C * 4,
    )

    out3 = pl.pallas_call(
        functools.partial(_bn_kernel, bf16_apply=bf16_apply),
        out_shape=jax.ShapeDtypeStruct((N, C, HW), x_nchw.dtype),
        grid=grid,
        in_specs=[
            pl.BlockSpec((N, tc, HW), lambda i: (0, i, 0)),
            pl.BlockSpec((1, tc, 1), lambda i: (0, i, 0)),
            pl.BlockSpec((1, tc, 1), lambda i: (0, i, 0)),
        ],
        out_specs=pl.BlockSpec((N, tc, HW), lambda i: (0, i, 0)),
        compiler_params=pltpu.CompilerParams(
            dimension_semantics=("parallel",),
            vmem_limit_bytes=32 << 20,
        ),
        cost_estimate=cost,
    )(x3, g3, b3)

    return out3.reshape(N, C, H, W)


def _reference(x_nchw, gamma, beta):
    x = x_nchw.astype(jnp.float32)
    mean = jnp.mean(x, axis=(0, 2, 3), keepdims=True)
    var = jnp.mean((x - mean) ** 2, axis=(0, 2, 3), keepdims=True)
    g = gamma.reshape(1, -1, 1, 1).astype(jnp.float32)
    b = beta.reshape(1, -1, 1, 1).astype(jnp.float32)
    y = (x - mean) * jax.lax.rsqrt(var + EPS) * g + b
    return y.astype(x_nchw.dtype)


if __name__ == "__main__":
    key = jax.random.PRNGKey(0)
    kx, kg, kb = jax.random.split(key, 3)

    # Same shapes as the module's example input: (1, 640, 7, 7)
    N, C, H, W = 1, 640, 7, 7
    x = jax.random.normal(kx, (N, C, H, W), dtype=jnp.float32)
    # Deterministic, non-trivial affine parameters of shape (C,)
    gamma = 1.0 + 0.1 * jax.random.normal(kg, (C,), dtype=jnp.float32)
    beta = 0.1 * jax.random.normal(kb, (C,), dtype=jnp.float32)

    out = batchnorm2d(x, gamma, beta)
    out = jax.block_until_ready(out)

    ref = _reference(x, gamma, beta)
    assert out.shape == (N, C, H, W)
    assert jnp.allclose(out, ref, atol=1e-4, rtol=1e-4), "mismatch vs reference"

    print("KERNEL_OK")
</pallas_src>

<mosaic_0001>
module attributes {stable_mosaic.version = 11 : i64} {
  func.func @_bn_kernel(%arg0: i32, %arg1: memref<1x640x49xf32, #tpu.memory_space<vmem>>, %arg2: memref<1x640x1xf32, #tpu.memory_space<vmem>>, %arg3: memref<1x640x1xf32, #tpu.memory_space<vmem>>, %arg4: memref<1x640x49xf32, #tpu.memory_space<vmem>>) attributes {dimension_semantics = [#tpu.dimension_semantics<parallel>], iteration_bounds = array<i64: 1>, scalar_prefetch = 0 : i64, scratch_operands = 0 : i64, tpu.core_type = #tpu.core_type<tc>, window_params = [{transform_indices = @transform_0, window_bounds = array<i64: 1, 640, 49>}, {transform_indices = @transform_1, window_bounds = array<i64: 1, 640, 1>}, {transform_indices = @transform_2, window_bounds = array<i64: 1, 640, 1>}, {transform_indices = @transform_3, window_bounds = array<i64: 1, 640, 49>}]} {
    %c0 = arith.constant 0 : index
    %c0_0 = arith.constant 0 : index
    %c0_1 = arith.constant 0 : index
    %0 = vector.load %arg1[%c0, %c0_0, %c0_1] : memref<1x640x49xf32, #tpu.memory_space<vmem>>, vector<1x640x49xf32>
    %cst = arith.constant dense<0.000000e+00> : vector<640xf32>
    %1 = vector.multi_reduction <add>, %0, %cst [0, 2] : vector<1x640x49xf32> to vector<640xf32>
    %2 = vector.shape_cast %1 : vector<640xf32> to vector<1x640x1xf32>
    %cst_2 = arith.constant 0.0204081628 : f32
    %3 = vector.broadcast %cst_2 : f32 to vector<1x640x1xf32>
    %4 = arith.mulf %2, %3 : vector<1x640x1xf32>
    %5 = vector.broadcast %4 : vector<1x640x1xf32> to vector<1x640x49xf32>
    %6 = arith.subf %0, %5 : vector<1x640x49xf32>
    %7 = arith.mulf %6, %6 : vector<1x640x49xf32>
    %cst_3 = arith.constant dense<0.000000e+00> : vector<640xf32>
    %8 = vector.multi_reduction <add>, %7, %cst_3 [0, 2] : vector<1x640x49xf32> to vector<640xf32>
    %9 = vector.shape_cast %8 : vector<640xf32> to vector<1x640x1xf32>
    %cst_4 = arith.constant 0.0204081628 : f32
    %10 = vector.broadcast %cst_4 : f32 to vector<1x640x1xf32>
    %11 = arith.mulf %9, %10 : vector<1x640x1xf32>
    %c0_5 = arith.constant 0 : index
    %c0_6 = arith.constant 0 : index
    %c0_7 = arith.constant 0 : index
    %12 = vector.load %arg2[%c0_5, %c0_6, %c0_7] : memref<1x640x1xf32, #tpu.memory_space<vmem>>, vector<1x640x1xf32>
    %c0_8 = arith.constant 0 : index
    %c0_9 = arith.constant 0 : index
    %c0_10 = arith.constant 0 : index
    %13 = vector.load %arg3[%c0_8, %c0_9, %c0_10] : memref<1x640x1xf32, #tpu.memory_space<vmem>>, vector<1x640x1xf32>
    %cst_11 = arith.constant 1.000000e-03 : f32
    %14 = vector.broadcast %cst_11 : f32 to vector<1x640x1xf32>
    %15 = arith.addf %11, %14 : vector<1x640x1xf32>
    %16 = math.rsqrt %15 : vector<1x640x1xf32>
    %17 = arith.mulf %12, %16 : vector<1x640x1xf32>
    %18 = arith.mulf %4, %17 : vector<1x640x1xf32>
    %19 = arith.subf %13, %18 : vector<1x640x1xf32>
    %20 = vector.broadcast %17 : vector<1x640x1xf32> to vector<1x640x49xf32>
    %21 = arith.mulf %0, %20 : vector<1x640x49xf32>
    %22 = vector.broadcast %19 : vector<1x640x1xf32> to vector<1x640x49xf32>
    %23 = arith.addf %21, %22 : vector<1x640x49xf32>
    %c0_12 = arith.constant 0 : index
    %c0_13 = arith.constant 0 : index
    %c0_14 = arith.constant 0 : index
    %24 = vector.load %arg4[%c0_12, %c0_13, %c0_14] : memref<1x640x49xf32, #tpu.memory_space<vmem>>, vector<1x640x49xf32>
    tpu.vector_store %arg4[%c0_12, %c0_13, %c0_14], %23 {strides = array<i32>} : memref<1x640x49xf32, #tpu.memory_space<vmem>>, vector<1x640x49xf32>,
    return
  }
  func.func @transform_0(%arg0: i32) -> (i32, i32, i32) {
    %c0_i32 = arith.constant 0 : i32
    %c0_i32_0 = arith.constant 0 : i32
    %c0_i32_1 = arith.constant 0 : i32
    return %c0_i32, %arg0, %c0_i32_0 : i32, i32, i32
  }
  func.func @transform_1(%arg0: i32) -> (i32, i32, i32) {
    %c0_i32 = arith.constant 0 : i32
    %c0_i32_0 = arith.constant 0 : i32
    %c0_i32_1 = arith.constant 0 : i32
    return %c0_i32, %arg0, %c0_i32_0 : i32, i32, i32
  }
  func.func @transform_2(%arg0: i32) -> (i32, i32, i32) {
    %c0_i32 = arith.constant 0 : i32
    %c0_i32_0 = arith.constant 0 : i32
    %c0_i32_1 = arith.constant 0 : i32
    return %c0_i32, %arg0, %c0_i32_0 : i32, i32, i32
  }
  func.func @transform_3(%arg0: i32) -> (i32, i32, i32) {
    %c0_i32 = arith.constant 0 : i32
    %c0_i32_0 = arith.constant 0 : i32
    %c0_i32_1 = arith.constant 0 : i32
    return %c0_i32, %arg0, %c0_i32_0 : i32, i32, i32
  }
}

</mosaic_0001>

<llo_original>
// kernel: tpu_custom_call.1
$region0: #{tpu_custom_call.1}
  #allocation0 [shape = 'u32[]', space=smem, size = 0x4, offset = 0x4, fixed_abs, tag = 'smem constant byte address 0x4 - core index']
  #allocation1 [shape = 'u32[72,128]{1,0:T(1,128)}', space=vmem, size = 0x9000, scoped, tag = 'internal scratch']
  %s0 = inlined_call_operand.vmem [shape: f32[1,640,49], index: 0, kind: input, shape index: {}]
  %s1 = inlined_call_operand.vmem [shape: f32[1,640,1], index: 1, kind: input, shape index: {}]
  %s2 = inlined_call_operand.vmem [shape: f32[1,640,1], index: 2, kind: input, shape index: {}]
  %s3 = inlined_call_operand.vmem [shape: f32[1,640,49], index: 3, kind: output, shape index: {}]
  %s4 = sld [smem:[#allocation0]]
  $region22: #{tpu_custom_call.1} parent=0
    _
  %s6 = ssub.s32 1, %s4
  %s7 = scalar_select 0, %s6, %s4
  // Predicated region
  $region2: #{tpu_custom_call.1} parent=0 // pred_check
    _
  $region3: #{tpu_custom_call.1} parent=0 // pred_check_branch
    %9 = sbr.rel (0) target = $region5
  $region4: #{tpu_custom_call.1} parent=0 // pred_region
    _
  $region5: #{tpu_custom_call.1} parent=0 // pred_fallthru
    _
  // Predicated region
  $region6: #{tpu_custom_call.1} parent=0 // pred_check
    _
  $region7: #{tpu_custom_call.1} parent=0 // pred_check_branch
    %11 = sbr.rel (0) target = $region9
  $region8: #{tpu_custom_call.1} parent=0 // pred_region
    _
  $region9: #{tpu_custom_call.1} parent=0 // pred_fallthru
    _
  // Predicated region
  $region10: #{tpu_custom_call.1} parent=0 // pred_check
    _
  $region11: #{tpu_custom_call.1} parent=0 // pred_check_branch
    %13 = sbr.rel (0) target = $region13
  $region12: #{tpu_custom_call.1} parent=0 // pred_region
    _
  $region13: #{tpu_custom_call.1} parent=0 // pred_fallthru
    _
  %v14 = vld [vmem:[%s0] sm:$0xff]
  %v15 = vld [vmem:[%s0 + $0x8] sm:$0xff]
  %v16 = vld [vmem:[%s0 + $0x10] sm:$0xff]
  %v17 = vld [vmem:[%s0 + $0x18] sm:$0xff]
  %v18 = vld [vmem:[%s0 + $0x20] sm:$0xff]
  %v19 = vld [vmem:[%s0 + $0x28] sm:$0xff]
  %v20 = vld [vmem:[%s0 + $0x30] sm:$0xff]
  %v21 = vld [vmem:[%s0 + $0x38] sm:$0xff]
  %v22 = vld [vmem:[%s0 + $0x40] sm:$0xff]
  %v23 = vld [vmem:[%s0 + $0x48] sm:$0xff]
  %v24 = vld [vmem:[%s0 + $0x50] sm:$0xff]
  %v25 = vld [vmem:[%s0 + $0x58] sm:$0xff]
  %v26 = vld [vmem:[%s0 + $0x60] sm:$0xff]
  %v27 = vld [vmem:[%s0 + $0x68] sm:$0xff]
  %v28 = vld [vmem:[%s0 + $0x70] sm:$0xff]
  %v29 = vld [vmem:[%s0 + $0x78] sm:$0xff]
  %v30 = vld [vmem:[%s0 + $0x80] sm:$0xff]
  %v31 = vld [vmem:[%s0 + $0x88] sm:$0xff]
  %v32 = vld [vmem:[%s0 + $0x90] sm:$0xff]
  %v33 = vld [vmem:[%s0 + $0x98] sm:$0xff]
  %v34 = vld [vmem:[%s0 + $0xa0] sm:$0xff]
  %v35 = vld [vmem:[%s0 + $0xa8] sm:$0xff]
  %v36 = vld [vmem:[%s0 + $0xb0] sm:$0xff]
  %v37 = vld [vmem:[%s0 + $0xb8] sm:$0xff]
  %v38 = vld [vmem:[%s0 + $0xc0] sm:$0xff]
  %v39 = vld [vmem:[%s0 + $0xc8] sm:$0xff]
  %v40 = vld [vmem:[%s0 + $0xd0] sm:$0xff]
  %v41 = vld [vmem:[%s0 + $0xd8] sm:$0xff]
  %v42 = vld [vmem:[%s0 + $0xe0] sm:$0xff]
  %v43 = vld [vmem:[%s0 + $0xe8] sm:$0xff]
  %v44 = vld [vmem:[%s0 + $0xf0] sm:$0xff]
  %v45 = vld [vmem:[%s0 + $0xf8] sm:$0xff]
  %v46 = vld [vmem:[%s0 + $0x100] sm:$0xff]
  %v47 = vld [vmem:[%s0 + $0x108] sm:$0xff]
  %v48 = vld [vmem:[%s0 + $0x110] sm:$0xff]
  %v49 = vld [vmem:[%s0 + $0x118] sm:$0xff]
  %v50 = vld [vmem:[%s0 + $0x120] sm:$0xff]
  %v51 = vld [vmem:[%s0 + $0x128] sm:$0xff]
  %v52 = vld [vmem:[%s0 + $0x130] sm:$0xff]
  %v53 = vld [vmem:[%s0 + $0x138] sm:$0xff]
  %v54 = vld [vmem:[%s0 + $0x140] sm:$0xff]
  %v55 = vld [vmem:[%s0 + $0x148] sm:$0xff]
  %v56 = vld [vmem:[%s0 + $0x150] sm:$0xff]
  %v57 = vld [vmem:[%s0 + $0x158] sm:$0xff]
  %v58 = vld [vmem:[%s0 + $0x160] sm:$0xff]
  %v59 = vld [vmem:[%s0 + $0x168] sm:$0xff]
  %v60 = vld [vmem:[%s0 + $0x170] sm:$0xff]
  %v61 = vld [vmem:[%s0 + $0x178] sm:$0xff]
  %v62 = vld [vmem:[%s0 + $0x180] sm:$0xff]
  %v63 = vld [vmem:[%s0 + $0x188] sm:$0xff]
  %v64 = vld [vmem:[%s0 + $0x190] sm:$0xff]
  %v65 = vld [vmem:[%s0 + $0x198] sm:$0xff]
  %v66 = vld [vmem:[%s0 + $0x1a0] sm:$0xff]
  %v67 = vld [vmem:[%s0 + $0x1a8] sm:$0xff]
  %v68 = vld [vmem:[%s0 + $0x1b0] sm:$0xff]
  %v69 = vld [vmem:[%s0 + $0x1b8] sm:$0xff]
  %v70 = vld [vmem:[%s0 + $0x1c0] sm:$0xff]
  %v71 = vld [vmem:[%s0 + $0x1c8] sm:$0xff]
  %v72 = vld [vmem:[%s0 + $0x1d0] sm:$0xff]
  %v73 = vld [vmem:[%s0 + $0x1d8] sm:$0xff]
  %v74 = vld [vmem:[%s0 + $0x1e0] sm:$0xff]
  %v75 = vld [vmem:[%s0 + $0x1e8] sm:$0xff]
  %v76 = vld [vmem:[%s0 + $0x1f0] sm:$0xff]
  %v77 = vld [vmem:[%s0 + $0x1f8] sm:$0xff]
  %v78 = vld [vmem:[%s0 + $0x200] sm:$0xff]
  %v79 = vld [vmem:[%s0 + $0x208] sm:$0xff]
  %v80 = vld [vmem:[%s0 + $0x210] sm:$0xff]
  %v81 = vld [vmem:[%s0 + $0x218] sm:$0xff]
  %v82 = vld [vmem:[%s0 + $0x220] sm:$0xff]
  %v83 = vld [vmem:[%s0 + $0x228] sm:$0xff]
  %v84 = vld [vmem:[%s0 + $0x230] sm:$0xff]
  %v85 = vld [vmem:[%s0 + $0x238] sm:$0xff]
  %v86 = vld [vmem:[%s0 + $0x240] sm:$0xff]
  %v87 = vld [vmem:[%s0 + $0x248] sm:$0xff]
  %v88 = vld [vmem:[%s0 + $0x250] sm:$0xff]
  %v89 = vld [vmem:[%s0 + $0x258] sm:$0xff]
  %v90 = vld [vmem:[%s0 + $0x260] sm:$0xff]
  %v91 = vld [vmem:[%s0 + $0x268] sm:$0xff]
  %v92 = vld [vmem:[%s0 + $0x270] sm:$0xff]
  %v93 = vld [vmem:[%s0 + $0x278] sm:$0xff]
  %vm94 = vcmask 400384
  %v95 = vsel %vm94, %v14, 0.0
  %96 = vadd.xlane.f32.xlu0 %v95
  %v97 = vpop.xlane.xlu0 %96
  %v98 = vsel %vm94, %v15, 0.0
  %99 = vadd.xlane.f32.xlu0 %v98
  %v100 = vpop.xlane.xlu0 %99
  %v101 = vsel %vm94, %v16, 0.0
  %102 = vadd.xlane.f32.xlu0 %v101
  %v103 = vpop.xlane.xlu0 %102
  %v104 = vsel %vm94, %v17, 0.0
  %105 = vadd.xlane.f32.xlu0 %v104
  %v106 = vpop.xlane.xlu0 %105
  %v107 = vsel %vm94, %v18, 0.0
  %108 = vadd.xlane.f32.xlu0 %v107
  %v109 = vpop.xlane.xlu0 %108
  %v110 = vsel %vm94, %v19, 0.0
  %111 = vadd.xlane.f32.xlu0 %v110
  %v112 = vpop.xlane.xlu0 %111
  %v113 = vsel %vm94, %v20, 0.0
  %114 = vadd.xlane.f32.xlu0 %v113
  %v115 = vpop.xlane.xlu0 %114
  %v116 = vsel %vm94, %v21, 0.0
  %117 = vadd.xlane.f32.xlu0 %v116
  %v118 = vpop.xlane.xlu0 %117
  %v119 = vsel %vm94, %v22, 0.0
  %120 = vadd.xlane.f32.xlu0 %v119
  %v121 = vpop.xlane.xlu0 %120
  %v122 = vsel %vm94, %v23, 0.0
  %123 = vadd.xlane.f32.xlu0 %v122
  %v124 = vpop.xlane.xlu0 %123
  %v125 = vsel %vm94, %v24, 0.0
  %126 = vadd.xlane.f32.xlu0 %v125
  %v127 = vpop.xlane.xlu0 %126
  %v128 = vsel %vm94, %v25, 0.0
  %129 = vadd.xlane.f32.xlu0 %v128
  %v130 = vpop.xlane.xlu0 %129
  %v131 = vsel %vm94, %v26, 0.0
  %132 = vadd.xlane.f32.xlu0 %v131
  %v133 = vpop.xlane.xlu0 %132
  %v134 = vsel %vm94, %v27, 0.0
  %135 = vadd.xlane.f32.xlu0 %v134
  %v136 = vpop.xlane.xlu0 %135
  %v137 = vsel %vm94, %v28, 0.0
  %138 = vadd.xlane.f32.xlu0 %v137
  %v139 = vpop.xlane.xlu0 %138
  %v140 = vsel %vm94, %v29, 0.0
  %141 = vadd.xlane.f32.xlu0 %v140
  %v142 = vpop.xlane.xlu0 %141
  %v143 = vsel %vm94, %v30, 0.0
  %144 = vadd.xlane.f32.xlu0 %v143
  %v145 = vpop.xlane.xlu0 %144
  %v146 = vsel %vm94, %v31, 0.0
  %147 = vadd.xlane.f32.xlu0 %v146
  %v148 = vpop.xlane.xlu0 %147
  %v149 = vsel %vm94, %v32, 0.0
  %150 = vadd.xlane.f32.xlu0 %v149
  %v151 = vpop.xlane.xlu0 %150
  %v152 = vsel %vm94, %v33, 0.0
  %153 = vadd.xlane.f32.xlu0 %v152
  %v154 = vpop.xlane.xlu0 %153
  %v155 = vsel %vm94, %v34, 0.0
  %156 = vadd.xlane.f32.xlu0 %v155
  %v157 = vpop.xlane.xlu0 %156
  %v158 = vsel %vm94, %v35, 0.0
  %159 = vadd.xlane.f32.xlu0 %v158
  %v160 = vpop.xlane.xlu0 %159
  %v161 = vsel %vm94, %v36, 0.0
  %162 = vadd.xlane.f32.xlu0 %v161
  %v163 = vpop.xlane.xlu0 %162
  %v164 = vsel %vm94, %v37, 0.0
  %165 = vadd.xlane.f32.xlu0 %v164
  %v166 = vpop.xlane.xlu0 %165
  %v167 = vsel %vm94, %v38, 0.0
  %168 = vadd.xlane.f32.xlu0 %v167
  %v169 = vpop.xlane.xlu0 %168
  %v170 = vsel %vm94, %v39, 0.0
  %171 = vadd.xlane.f32.xlu0 %v170
  %v172 = vpop.xlane.xlu0 %171
  %v173 = vsel %vm94, %v40, 0.0
  %174 = vadd.xlane.f32.xlu0 %v173
  %v175 = vpop.xlane.xlu0 %174
  %v176 = vsel %vm94, %v41, 0.0
  %177 = vadd.xlane.f32.xlu0 %v176
  %v178 = vpop.xlane.xlu0 %177
  %v179 = vsel %vm94, %v42, 0.0
  %180 = vadd.xlane.f32.xlu0 %v179
  %v181 = vpop.xlane.xlu0 %180
  %v182 = vsel %vm94, %v43, 0.0
  %183 = vadd.xlane.f32.xlu0 %v182
  %v184 = vpop.xlane.xlu0 %183
  %v185 = vsel %vm94, %v44, 0.0
  %186 = vadd.xlane.f32.xlu0 %v185
  %v187 = vpop.xlane.xlu0 %186
  %v188 = vsel %vm94, %v45, 0.0
  %189 = vadd.xlane.f32.xlu0 %v188
  %v190 = vpop.xlane.xlu0 %189
  %v191 = vsel %vm94, %v46, 0.0
  %192 = vadd.xlane.f32.xlu0 %v191
  %v193 = vpop.xlane.xlu0 %192
  %v194 = vsel %vm94, %v47, 0.0
  %195 = vadd.xlane.f32.xlu0 %v194
  %v196 = vpop.xlane.xlu0 %195
  %v197 = vsel %vm94, %v48, 0.0
  %198 = vadd.xlane.f32.xlu0 %v197
  %v199 = vpop.xlane.xlu0 %198
  %v200 = vsel %vm94, %v49, 0.0
  %201 = vadd.xlane.f32.xlu0 %v200
  %v202 = vpop.xlane.xlu0 %201
  %v203 = vsel %vm94, %v50, 0.0
  %204 = vadd.xlane.f32.xlu0 %v203
  %v205 = vpop.xlane.xlu0 %204
  %v206 = vsel %vm94, %v51, 0.0
  %207 = vadd.xlane.f32.xlu0 %v206
  %v208 = vpop.xlane.xlu0 %207
  %v209 = vsel %vm94, %v52, 0.0
  %210 = vadd.xlane.f32.xlu0 %v209
  %v211 = vpop.xlane.xlu0 %210
  %v212 = vsel %vm94, %v53, 0.0
  %213 = vadd.xlane.f32.xlu0 %v212
  %v214 = vpop.xlane.xlu0 %213
  %v215 = vsel %vm94, %v54, 0.0
  %216 = vadd.xlane.f32.xlu0 %v215
  %v217 = vpop.xlane.xlu0 %216
  %v218 = vsel %vm94, %v55, 0.0
  %219 = vadd.xlane.f32.xlu0 %v218
  %v220 = vpop.xlane.xlu0 %219
  %v221 = vsel %vm94, %v56, 0.0
  %222 = vadd.xlane.f32.xlu0 %v221
  %v223 = vpop.xlane.xlu0 %222
  %v224 = vsel %vm94, %v57, 0.0
  %225 = vadd.xlane.f32.xlu0 %v224
  %v226 = vpop.xlane.xlu0 %225
  %v227 = vsel %vm94, %v58, 0.0
  %228 = vadd.xlane.f32.xlu0 %v227
  %v229 = vpop.xlane.xlu0 %228
  %v230 = vsel %vm94, %v59, 0.0
  %231 = vadd.xlane.f32.xlu0 %v230
  %v232 = vpop.xlane.xlu0 %231
  %v233 = vsel %vm94, %v60, 0.0
  %234 = vadd.xlane.f32.xlu0 %v233
  %v235 = vpop.xlane.xlu0 %234
  %v236 = vsel %vm94, %v61, 0.0
  %237 = vadd.xlane.f32.xlu0 %v236
  %v238 = vpop.xlane.xlu0 %237
  %v239 = vsel %vm94, %v62, 0.0
  %240 = vadd.xlane.f32.xlu0 %v239
  %v241 = vpop.xlane.xlu0 %240
  %v242 = vsel %vm94, %v63, 0.0
  %243 = vadd.xlane.f32.xlu0 %v242
  %v244 = vpop.xlane.xlu0 %243
  %v245 = vsel %vm94, %v64, 0.0
  %246 = vadd.xlane.f32.xlu0 %v245
  %v247 = vpop.xlane.xlu0 %246
  %v248 = vsel %vm94, %v65, 0.0
  %249 = vadd.xlane.f32.xlu0 %v248
  %v250 = vpop.xlane.xlu0 %249
  %v251 = vsel %vm94, %v66, 0.0
  %252 = vadd.xlane.f32.xlu0 %v251
  %v253 = vpop.xlane.xlu0 %252
  %v254 = vsel %vm94, %v67, 0.0
  %255 = vadd.xlane.f32.xlu0 %v254
  %v256 = vpop.xlane.xlu0 %255
  %v257 = vsel %vm94, %v68, 0.0
  %258 = vadd.xlane.f32.xlu0 %v257
  %v259 = vpop.xlane.xlu0 %258
  %v260 = vsel %vm94, %v69, 0.0
  %261 = vadd.xlane.f32.xlu0 %v260
  %v262 = vpop.xlane.xlu0 %261
  %v263 = vsel %vm94, %v70, 0.0
  %264 = vadd.xlane.f32.xlu0 %v263
  %v265 = vpop.xlane.xlu0 %264
  %v266 = vsel %vm94, %v71, 0.0
  %267 = vadd.xlane.f32.xlu0 %v266
  %v268 = vpop.xlane.xlu0 %267
  %v269 = vsel %vm94, %v72, 0.0
  %270 = vadd.xlane.f32.xlu0 %v269
  %v271 = vpop.xlane.xlu0 %270
  %v272 = vsel %vm94, %v73, 0.0
  %273 = vadd.xlane.f32.xlu0 %v272
  %v274 = vpop.xlane.xlu0 %273
  %v275 = vsel %vm94, %v74, 0.0
  %276 = vadd.xlane.f32.xlu0 %v275
  %v277 = vpop.xlane.xlu0 %276
  %v278 = vsel %vm94, %v75, 0.0
  %279 = vadd.xlane.f32.xlu0 %v278
  %v280 = vpop.xlane.xlu0 %279
  %v281 = vsel %vm94, %v76, 0.0
  %282 = vadd.xlane.f32.xlu0 %v281
  %v283 = vpop.xlane.xlu0 %282
  %v284 = vsel %vm94, %v77, 0.0
  %285 = vadd.xlane.f32.xlu0 %v284
  %v286 = vpop.xlane.xlu0 %285
  %v287 = vsel %vm94, %v78, 0.0
  %288 = vadd.xlane.f32.xlu0 %v287
  %v289 = vpop.xlane.xlu0 %288
  %v290 = vsel %vm94, %v79, 0.0
  %291 = vadd.xlane.f32.xlu0 %v290
  %v292 = vpop.xlane.xlu0 %291
  %v293 = vsel %vm94, %v80, 0.0
  %294 = vadd.xlane.f32.xlu0 %v293
  %v295 = vpop.xlane.xlu0 %294
  %v296 = vsel %vm94, %v81, 0.0
  %297 = vadd.xlane.f32.xlu0 %v296
  %v298 = vpop.xlane.xlu0 %297
  %v299 = vsel %vm94, %v82, 0.0
  %300 = vadd.xlane.f32.xlu0 %v299
  %v301 = vpop.xlane.xlu0 %300
  %v302 = vsel %vm94, %v83, 0.0
  %303 = vadd.xlane.f32.xlu0 %v302
  %v304 = vpop.xlane.xlu0 %303
  %v305 = vsel %vm94, %v84, 0.0
  %306 = vadd.xlane.f32.xlu0 %v305
  %v307 = vpop.xlane.xlu0 %306
  %v308 = vsel %vm94, %v85, 0.0
  %309 = vadd.xlane.f32.xlu0 %v308
  %v310 = vpop.xlane.xlu0 %309
  %v311 = vsel %vm94, %v86, 0.0
  %312 = vadd.xlane.f32.xlu0 %v311
  %v313 = vpop.xlane.xlu0 %312
  %v314 = vsel %vm94, %v87, 0.0
  %315 = vadd.xlane.f32.xlu0 %v314
  %v316 = vpop.xlane.xlu0 %315
  %v317 = vsel %vm94, %v88, 0.0
  %318 = vadd.xlane.f32.xlu0 %v317
  %v319 = vpop.xlane.xlu0 %318
  %v320 = vsel %vm94, %v89, 0.0
  %321 = vadd.xlane.f32.xlu0 %v320
  %v322 = vpop.xlane.xlu0 %321
  %v323 = vsel %vm94, %v90, 0.0
  %324 = vadd.xlane.f32.xlu0 %v323
  %v325 = vpop.xlane.xlu0 %324
  %v326 = vsel %vm94, %v91, 0.0
  %327 = vadd.xlane.f32.xlu0 %v326
  %v328 = vpop.xlane.xlu0 %327
  %v329 = vsel %vm94, %v92, 0.0
  %330 = vadd.xlane.f32.xlu0 %v329
  %v331 = vpop.xlane.xlu0 %330
  %v332 = vsel %vm94, %v93, 0.0
  %333 = vadd.xlane.f32.xlu0 %v332
  %v334 = vpop.xlane.xlu0 %333
  %v335 = vmul.f32 %v97, 0.020408163
  %v336 = vmul.f32 %v100, 0.020408163
  %v337 = vmul.f32 %v103, 0.020408163
  %v338 = vmul.f32 %v106, 0.020408163
  %v339 = vmul.f32 %v109, 0.020408163
  %v340 = vmul.f32 %v112, 0.020408163
  %v341 = vmul.f32 %v115, 0.020408163
  %v342 = vmul.f32 %v118, 0.020408163
  %v343 = vmul.f32 %v121, 0.020408163
  %v344 = vmul.f32 %v124, 0.020408163
  %v345 = vmul.f32 %v127, 0.020408163
  %v346 = vmul.f32 %v130, 0.020408163
  %v347 = vmul.f32 %v133, 0.020408163
  %v348 = vmul.f32 %v136, 0.020408163
  %v349 = vmul.f32 %v139, 0.020408163
  %v350 = vmul.f32 %v142, 0.020408163
  %v351 = vmul.f32 %v145, 0.020408163
  %v352 = vmul.f32 %v148, 0.020408163
  %v353 = vmul.f32 %v151, 0.020408163
  %v354 = vmul.f32 %v154, 0.020408163
  %v355 = vmul.f32 %v157, 0.020408163
  %v356 = vmul.f32 %v160, 0.020408163
  %v357 = vmul.f32 %v163, 0.020408163
  %v358 = vmul.f32 %v166, 0.020408163
  %v359 = vmul.f32 %v169, 0.020408163
  %v360 = vmul.f32 %v172, 0.020408163
  %v361 = vmul.f32 %v175, 0.020408163
  %v362 = vmul.f32 %v178, 0.020408163
  %v363 = vmul.f32 %v181, 0.020408163
  %v364 = vmul.f32 %v184, 0.020408163
  %v365 = vmul.f32 %v187, 0.020408163
  %v366 = vmul.f32 %v190, 0.020408163
  %v367 = vmul.f32 %v193, 0.020408163
  %v368 = vmul.f32 %v196, 0.020408163
  %v369 = vmul.f32 %v199, 0.020408163
  %v370 = vmul.f32 %v202, 0.020408163
  %v371 = vmul.f32 %v205, 0.020408163
  %v372 = vmul.f32 %v208, 0.020408163
  %v373 = vmul.f32 %v211, 0.020408163
  %v374 = vmul.f32 %v214, 0.020408163
  %v375 = vmul.f32 %v217, 0.020408163
  %v376 = vmul.f32 %v220, 0.020408163
  %v377 = vmul.f32 %v223, 0.020408163
  %v378 = vmul.f32 %v226, 0.020408163
  %v379 = vmul.f32 %v229, 0.020408163
  %v380 = vmul.f32 %v232, 0.020408163
  %v381 = vmul.f32 %v235, 0.020408163
  %v382 = vmul.f32 %v238, 0.020408163
  %v383 = vmul.f32 %v241, 0.020408163
  %v384 = vmul.f32 %v244, 0.020408163
  %v385 = vmul.f32 %v247, 0.020408163
  %v386 = vmul.f32 %v250, 0.020408163
  %v387 = vmul.f32 %v253, 0.020408163
  %v388 = vmul.f32 %v256, 0.020408163
  %v389 = vmul.f32 %v259, 0.020408163
  %v390 = vmul.f32 %v262, 0.020408163
  %v391 = vmul.f32 %v265, 0.020408163
  %v392 = vmul.f32 %v268, 0.020408163
  %v393 = vmul.f32 %v271, 0.020408163
  %v394 = vmul.f32 %v274, 0.020408163
  %v395 = vmul.f32 %v277, 0.020408163
  %v396 = vmul.f32 %v280, 0.020408163
  %v397 = vmul.f32 %v283, 0.020408163
  %v398 = vmul.f32 %v286, 0.020408163
  %v399 = vmul.f32 %v289, 0.020408163
  %v400 = vmul.f32 %v292, 0.020408163
  %v401 = vmul.f32 %v295, 0.020408163
  %v402 = vmul.f32 %v298, 0.020408163
  %v403 = vmul.f32 %v301, 0.020408163
  %v404 = vmul.f32 %v304, 0.020408163
  %v405 = vmul.f32 %v307, 0.020408163
  %v406 = vmul.f32 %v310, 0.020408163
  %v407 = vmul.f32 %v313, 0.020408163
  %v408 = vmul.f32 %v316, 0.020408163
  %v409 = vmul.f32 %v319, 0.020408163
  %v410 = vmul.f32 %v322, 0.020408163
  %v411 = vmul.f32 %v325, 0.020408163
  %v412 = vmul.f32 %v328, 0.020408163
  %v413 = vmul.f32 %v331, 0.020408163
  %v414 = vmul.f32 %v334, 0.020408163
  %v415 = vsub.f32 %v14, %v335
  %v416 = vsub.f32 %v15, %v336
  %v417 = vsub.f32 %v16, %v337
  %v418 = vsub.f32 %v17, %v338
  %v419 = vsub.f32 %v18, %v339
  %v420 = vsub.f32 %v19, %v340
  %v421 = vsub.f32 %v20, %v341
  %v422 = vsub.f32 %v21, %v342
  %v423 = vsub.f32 %v22, %v343
  %v424 = vsub.f32 %v23, %v344
  %v425 = vsub.f32 %v24, %v345
  %v426 = vsub.f32 %v25, %v346
  %v427 = vsub.f32 %v26, %v347
  %v428 = vsub.f32 %v27, %v348
  %v429 = vsub.f32 %v28, %v349
  %v430 = vsub.f32 %v29, %v350
  %v431 = vsub.f32 %v30, %v351
  %v432 = vsub.f32 %v31, %v352
  %v433 = vsub.f32 %v32, %v353
  %v434 = vsub.f32 %v33, %v354
  %v435 = vsub.f32 %v34, %v355
  %v436 = vsub.f32 %v35, %v356
  %v437 = vsub.f32 %v36, %v357
  %v438 = vsub.f32 %v37, %v358
  %v439 = vsub.f32 %v38, %v359
  %v440 = vsub.f32 %v39, %v360
  %v441 = vsub.f32 %v40, %v361
  %v442 = vsub.f32 %v41, %v362
  %v443 = vsub.f32 %v42, %v363
  %v444 = vsub.f32 %v43, %v364
  %v445 = vsub.f32 %v44, %v365
  %v446 = vsub.f32 %v45, %v366
  %v447 = vsub.f32 %v46, %v367
  %v448 = vsub.f32 %v47, %v368
  %v449 = vsub.f32 %v48, %v369
  %v450 = vsub.f32 %v49, %v370
  %v451 = vsub.f32 %v50, %v371
  %v452 = vsub.f32 %v51, %v372
  %v453 = vsub.f32 %v52, %v373
  %v454 = vsub.f32 %v53, %v374
  %v455 = vsub.f32 %v54, %v375
  %v456 = vsub.f32 %v55, %v376
  %v457 = vsub.f32 %v56, %v377
  %v458 = vsub.f32 %v57, %v378
  %v459 = vsub.f32 %v58, %v379
  %v460 = vsub.f32 %v59, %v380
  %v461 = vsub.f32 %v60, %v381
  %v462 = vsub.f32 %v61, %v382
  %v463 = vsub.f32 %v62, %v383
  %v464 = vsub.f32 %v63, %v384
  %v465 = vsub.f32 %v64, %v385
  %v466 = vsub.f32 %v65, %v386
  %v467 = vsub.f32 %v66, %v387
  %v468 = vsub.f32 %v67, %v388
  %v469 = vsub.f32 %v68, %v389
  %v470 = vsub.f32 %v69, %v390
  %v471 = vsub.f32 %v70, %v391
  %v472 = vsub.f32 %v71, %v392
  %v473 = vsub.f32 %v72, %v393
  %v474 = vsub.f32 %v73, %v394
  %v475 = vsub.f32 %v74, %v395
  %v476 = vsub.f32 %v75, %v396
  %v477 = vsub.f32 %v76, %v397
  %v478 = vsub.f32 %v77, %v398
  %v479 = vsub.f32 %v78, %v399
  %v480 = vsub.f32 %v79, %v400
  %v481 = vsub.f32 %v80, %v401
  %v482 = vsub.f32 %v81, %v402
  %v483 = vsub.f32 %v82, %v403
  %v484 = vsub.f32 %v83, %v404
  %v485 = vsub.f32 %v84, %v405
  %v486 = vsub.f32 %v85, %v406
  %v487 = vsub.f32 %v86, %v407
  %v488 = vsub.f32 %v87, %v408
  %v489 = vsub.f32 %v88, %v409
  %v490 = vsub.f32 %v89, %v410
  %v491 = vsub.f32 %v90, %v411
  %v492 = vsub.f32 %v91, %v412
  %v493 = vsub.f32 %v92, %v413
  %v494 = vsub.f32 %v93, %v414
  %v495 = vmul.f32 %v415, %v415
  %v496 = vmul.f32 %v416, %v416
  %v497 = vmul.f32 %v417, %v417
  %v498 = vmul.f32 %v418, %v418
  %v499 = vmul.f32 %v419, %v419
  %v500 = vmul.f32 %v420, %v420
  %v501 = vmul.f32 %v421, %v421
  %v502 = vmul.f32 %v422, %v422
  %v503 = vmul.f32 %v423, %v423
  %v504 = vmul.f32 %v424, %v424
  %v505 = vmul.f32 %v425, %v425
  %v506 = vmul.f32 %v426, %v426
  %v507 = vmul.f32 %v427, %v427
  %v508 = vmul.f32 %v428, %v428
  %v509 = vmul.f32 %v429, %v429
  %v510 = vmul.f32 %v430, %v430
  %v511 = vmul.f32 %v431, %v431
  %v512 = vmul.f32 %v432, %v432
  %v513 = vmul.f32 %v433, %v433
  %v514 = vmul.f32 %v434, %v434
  %v515 = vmul.f32 %v435, %v435
  %v516 = vmul.f32 %v436, %v436
  %v517 = vmul.f32 %v437, %v437
  %v518 = vmul.f32 %v438, %v438
  %v519 = vmul.f32 %v439, %v439
  %v520 = vmul.f32 %v440, %v440
  %v521 = vmul.f32 %v441, %v441
  %v522 = vmul.f32 %v442, %v442
  %v523 = vmul.f32 %v443, %v443
  %v524 = vmul.f32 %v444, %v444
  %v525 = vmul.f32 %v445, %v445
  %v526 = vmul.f32 %v446, %v446
  %v527 = vmul.f32 %v447, %v447
  %v528 = vmul.f32 %v448, %v448
  %v529 = vmul.f32 %v449, %v449
  %v530 = vmul.f32 %v450, %v450
  %v531 = vmul.f32 %v451, %v451
  %v532 = vmul.f32 %v452, %v452
  %v533 = vmul.f32 %v453, %v453
  %v534 = vmul.f32 %v454, %v454
  %v535 = vmul.f32 %v455, %v455
  %v536 = vmul.f32 %v456, %v456
  %v537 = vmul.f32 %v457, %v457
  %v538 = vmul.f32 %v458, %v458
  %v539 = vmul.f32 %v459, %v459
  %v540 = vmul.f32 %v460, %v460
  %v541 = vmul.f32 %v461, %v461
  %v542 = vmul.f32 %v462, %v462
  %v543 = vmul.f32 %v463, %v463
  %v544 = vmul.f32 %v464, %v464
  %v545 = vmul.f32 %v465, %v465
  %v546 = vmul.f32 %v466, %v466
  %v547 = vmul.f32 %v467, %v467
  %v548 = vmul.f32 %v468, %v468
  %v549 = vmul.f32 %v469, %v469
  %v550 = vmul.f32 %v470, %v470
  %v551 = vmul.f32 %v471, %v471
  %v552 = vmul.f32 %v472, %v472
  %v553 = vmul.f32 %v473, %v473
  %v554 = vmul.f32 %v474, %v474
  %v555 = vmul.f32 %v475, %v475
  %v556 = vmul.f32 %v476, %v476
  %v557 = vmul.f32 %v477, %v477
  %v558 = vmul.f32 %v478, %v478
  %v559 = vmul.f32 %v479, %v479
  %v560 = vmul.f32 %v480, %v480
  %v561 = vmul.f32 %v481, %v481
  %v562 = vmul.f32 %v482, %v482
  %v563 = vmul.f32 %v483, %v483
  %v564 = vmul.f32 %v484, %v484
  %v565 = vmul.f32 %v485, %v485
  %v566 = vmul.f32 %v486, %v486
  %v567 = vmul.f32 %v487, %v487
  %v568 = vmul.f32 %v488, %v488
  %v569 = vmul.f32 %v489, %v489
  %v570 = vmul.f32 %v490, %v490
  %v571 = vmul.f32 %v491, %v491
  %v572 = vmul.f32 %v492, %v492
  %v573 = vmul.f32 %v493, %v493
  %v574 = vmul.f32 %v494, %v494
  %v575 = vsel %vm94, %v495, 0.0
  %576 = vadd.xlane.f32.xlu0 %v575
  %v577 = vpop.xlane.xlu0 %576
  %v578 = vsel %vm94, %v496, 0.0
  %579 = vadd.xlane.f32.xlu0 %v578
  %v580 = vpop.xlane.xlu0 %579
  %v581 = vsel %vm94, %v497, 0.0
  %582 = vadd.xlane.f32.xlu0 %v581
  %v583 = vpop.xlane.xlu0 %582
  %v584 = vsel %vm94, %v498, 0.0
  %585 = vadd.xlane.f32.xlu0 %v584
  %v586 = vpop.xlane.xlu0 %585
  %v587 = vsel %vm94, %v499, 0.0
  %588 = vadd.xlane.f32.xlu0 %v587
  %v589 = vpop.xlane.xlu0 %588
  %v590 = vsel %vm94, %v500, 0.0
  %591 = vadd.xlane.f32.xlu0 %v590
  %v592 = vpop.xlane.xlu0 %591
  %v593 = vsel %vm94, %v501, 0.0
  %594 = vadd.xlane.f32.xlu0 %v593
  %v595 = vpop.xlane.xlu0 %594
  %v596 = vsel %vm94, %v502, 0.0
  %597 = vadd.xlane.f32.xlu0 %v596
  %v598 = vpop.xlane.xlu0 %597
  %v599 = vsel %vm94, %v503, 0.0
  %600 = vadd.xlane.f32.xlu0 %v599
  %v601 = vpop.xlane.xlu0 %600
  %v602 = vsel %vm94, %v504, 0.0
  %603 = vadd.xlane.f32.xlu0 %v602
  %v604 = vpop.xlane.xlu0 %603
  %v605 = vsel %vm94, %v505, 0.0
  %606 = vadd.xlane.f32.xlu0 %v605
  %v607 = vpop.xlane.xlu0 %606
  %v608 = vsel %vm94, %v506, 0.0
  %609 = vadd.xlane.f32.xlu0 %v608
  %v610 = vpop.xlane.xlu0 %609
  %v611 = vsel %vm94, %v507, 0.0
  %612 = vadd.xlane.f32.xlu0 %v611
  %v613 = vpop.xlane.xlu0 %612
  %v614 = vsel %vm94, %v508, 0.0
  %615 = vadd.xlane.f32.xlu0 %v614
  %v616 = vpop.xlane.xlu0 %615
  %v617 = vsel %vm94, %v509, 0.0
  %618 = vadd.xlane.f32.xlu0 %v617
  %v619 = vpop.xlane.xlu0 %618
  %v620 = vsel %vm94, %v510, 0.0
  %621 = vadd.xlane.f32.xlu0 %v620
  %v622 = vpop.xlane.xlu0 %621
  %v623 = vsel %vm94, %v511, 0.0
  %624 = vadd.xlane.f32.xlu0 %v623
  %v625 = vpop.xlane.xlu0 %624
  %v626 = vsel %vm94, %v512, 0.0
  %627 = vadd.xlane.f32.xlu0 %v626
  %v628 = vpop.xlane.xlu0 %627
  %v629 = vsel %vm94, %v513, 0.0
  %630 = vadd.xlane.f32.xlu0 %v629
  %v631 = vpop.xlane.xlu0 %630
  %v632 = vsel %vm94, %v514, 0.0
  %633 = vadd.xlane.f32.xlu0 %v632
  %v634 = vpop.xlane.xlu0 %633
  %v635 = vsel %vm94, %v515, 0.0
  %636 = vadd.xlane.f32.xlu0 %v635
  %v637 = vpop.xlane.xlu0 %636
  %v638 = vsel %vm94, %v516, 0.0
  %639 = vadd.xlane.f32.xlu0 %v638
  %v640 = vpop.xlane.xlu0 %639
  %v641 = vsel %vm94, %v517, 0.0
  %642 = vadd.xlane.f32.xlu0 %v641
  %v643 = vpop.xlane.xlu0 %642
  %v644 = vsel %vm94, %v518, 0.0
  %645 = vadd.xlane.f32.xlu0 %v644
  %v646 = vpop.xlane.xlu0 %645
  %v647 = vsel %vm94, %v519, 0.0
  %648 = vadd.xlane.f32.xlu0 %v647
  %v649 = vpop.xlane.xlu0 %648
  %v650 = vsel %vm94, %v520, 0.0
  %651 = vadd.xlane.f32.xlu0 %v650
  %v652 = vpop.xlane.xlu0 %651
  %v653 = vsel %vm94, %v521, 0.0
  %654 = vadd.xlane.f32.xlu0 %v653
  %v655 = vpop.xlane.xlu0 %654
  %v656 = vsel %vm94, %v522, 0.0
  %657 = vadd.xlane.f32.xlu0 %v656
  %v658 = vpop.xlane.xlu0 %657
  %v659 = vsel %vm94, %v523, 0.0
  %660 = vadd.xlane.f32.xlu0 %v659
  %v661 = vpop.xlane.xlu0 %660
  %v662 = vsel %vm94, %v524, 0.0
  %663 = vadd.xlane.f32.xlu0 %v662
  %v664 = vpop.xlane.xlu0 %663
  %v665 = vsel %vm94, %v525, 0.0
  %666 = vadd.xlane.f32.xlu0 %v665
  %v667 = vpop.xlane.xlu0 %666
  %v668 = vsel %vm94, %v526, 0.0
  %669 = vadd.xlane.f32.xlu0 %v668
  %v670 = vpop.xlane.xlu0 %669
  %v671 = vsel %vm94, %v527, 0.0
  %672 = vadd.xlane.f32.xlu0 %v671
  %v673 = vpop.xlane.xlu0 %672
  %v674 = vsel %vm94, %v528, 0.0
  %675 = vadd.xlane.f32.xlu0 %v674
  %v676 = vpop.xlane.xlu0 %675
  %v677 = vsel %vm94, %v529, 0.0
  %678 = vadd.xlane.f32.xlu0 %v677
  %v679 = vpop.xlane.xlu0 %678
  %v680 = vsel %vm94, %v530, 0.0
  %681 = vadd.xlane.f32.xlu0 %v680
  %v682 = vpop.xlane.xlu0 %681
  %v683 = vsel %vm94, %v531, 0.0
  %684 = vadd.xlane.f32.xlu0 %v683
  %v685 = vpop.xlane.xlu0 %684
  %v686 = vsel %vm94, %v532, 0.0
  %687 = vadd.xlane.f32.xlu0 %v686
  %v688 = vpop.xlane.xlu0 %687
  %v689 = vsel %vm94, %v533, 0.0
  %690 = vadd.xlane.f32.xlu0 %v689
  %v691 = vpop.xlane.xlu0 %690
  %v692 = vsel %vm94, %v534, 0.0
  %693 = vadd.xlane.f32.xlu0 %v692
  %v694 = vpop.xlane.xlu0 %693
  %v695 = vsel %vm94, %v535, 0.0
  %696 = vadd.xlane.f32.xlu0 %v695
  %v697 = vpop.xlane.xlu0 %696
  %v698 = vsel %vm94, %v536, 0.0
  %699 = vadd.xlane.f32.xlu0 %v698
  %v700 = vpop.xlane.xlu0 %699
  %v701 = vsel %vm94, %v537, 0.0
  %702 = vadd.xlane.f32.xlu0 %v701
  %v703 = vpop.xlane.xlu0 %702
  %v704 = vsel %vm94, %v538, 0.0
  %705 = vadd.xlane.f32.xlu0 %v704
  %v706 = vpop.xlane.xlu0 %705
  %v707 = vsel %vm94, %v539, 0.0
  %708 = vadd.xlane.f32.xlu0 %v707
  %v709 = vpop.xlane.xlu0 %708
  %v710 = vsel %vm94, %v540, 0.0
  %711 = vadd.xlane.f32.xlu0 %v710
  %v712 = vpop.xlane.xlu0 %711
  %v713 = vsel %vm94, %v541, 0.0
  %714 = vadd.xlane.f32.xlu0 %v713
  %v715 = vpop.xlane.xlu0 %714
  %v716 = vsel %vm94, %v542, 0.0
  %717 = vadd.xlane.f32.xlu0 %v716
  %v718 = vpop.xlane.xlu0 %717
  %v719 = vsel %vm94, %v543, 0.0
  %720 = vadd.xlane.f32.xlu0 %v719
  %v721 = vpop.xlane.xlu0 %720
  %v722 = vsel %vm94, %v544, 0.0
  %723 = vadd.xlane.f32.xlu0 %v722
  %v724 = vpop.xlane.xlu0 %723
  %v725 = vsel %vm94, %v545, 0.0
  %726 = vadd.xlane.f32.xlu0 %v725
  %v727 = vpop.xlane.xlu0 %726
  %v728 = vsel %vm94, %v546, 0.0
  %729 = vadd.xlane.f32.xlu0 %v728
  %v730 = vpop.xlane.xlu0 %729
  %v731 = vsel %vm94, %v547, 0.0
  %732 = vadd.xlane.f32.xlu0 %v731
  %v733 = vpop.xlane.xlu0 %732
  %v734 = vsel %vm94, %v548, 0.0
  %735 = vadd.xlane.f32.xlu0 %v734
  %v736 = vpop.xlane.xlu0 %735
  %v737 = vsel %vm94, %v549, 0.0
  %738 = vadd.xlane.f32.xlu0 %v737
  %v739 = vpop.xlane.xlu0 %738
  %v740 = vsel %vm94, %v550, 0.0
  %741 = vadd.xlane.f32.xlu0 %v740
  %v742 = vpop.xlane.xlu0 %741
  %v743 = vsel %vm94, %v551, 0.0
  %744 = vadd.xlane.f32.xlu0 %v743
  %v745 = vpop.xlane.xlu0 %744
  %v746 = vsel %vm94, %v552, 0.0
  %747 = vadd.xlane.f32.xlu0 %v746
  %v748 = vpop.xlane.xlu0 %747
  %v749 = vsel %vm94, %v553, 0.0
  %750 = vadd.xlane.f32.xlu0 %v749
  %v751 = vpop.xlane.xlu0 %750
  %v752 = vsel %vm94, %v554, 0.0
  %753 = vadd.xlane.f32.xlu0 %v752
  %v754 = vpop.xlane.xlu0 %753
  %v755 = vsel %vm94, %v555, 0.0
  %756 = vadd.xlane.f32.xlu0 %v755
  %v757 = vpop.xlane.xlu0 %756
  %v758 = vsel %vm94, %v556, 0.0
  %759 = vadd.xlane.f32.xlu0 %v758
  %v760 = vpop.xlane.xlu0 %759
  %v761 = vsel %vm94, %v557, 0.0
  %762 = vadd.xlane.f32.xlu0 %v761
  %v763 = vpop.xlane.xlu0 %762
  %v764 = vsel %vm94, %v558, 0.0
  %765 = vadd.xlane.f32.xlu0 %v764
  %v766 = vpop.xlane.xlu0 %765
  %v767 = vsel %vm94, %v559, 0.0
  %768 = vadd.xlane.f32.xlu0 %v767
  %v769 = vpop.xlane.xlu0 %768
  %v770 = vsel %vm94, %v560, 0.0
  %771 = vadd.xlane.f32.xlu0 %v770
  %v772 = vpop.xlane.xlu0 %771
  %v773 = vsel %vm94, %v561, 0.0
  %774 = vadd.xlane.f32.xlu0 %v773
  %v775 = vpop.xlane.xlu0 %774
  %v776 = vsel %vm94, %v562, 0.0
  %777 = vadd.xlane.f32.xlu0 %v776
  %v778 = vpop.xlane.xlu0 %777
  %v779 = vsel %vm94, %v563, 0.0
  %780 = vadd.xlane.f32.xlu0 %v779
  %v781 = vpop.xlane.xlu0 %780
  %v782 = vsel %vm94, %v564, 0.0
  %783 = vadd.xlane.f32.xlu0 %v782
  %v784 = vpop.xlane.xlu0 %783
  %v785 = vsel %vm94, %v565, 0.0
  %786 = vadd.xlane.f32.xlu0 %v785
  %v787 = vpop.xlane.xlu0 %786
  %v788 = vsel %vm94, %v566, 0.0
  %789 = vadd.xlane.f32.xlu0 %v788
  %v790 = vpop.xlane.xlu0 %789
  %v791 = vsel %vm94, %v567, 0.0
  %792 = vadd.xlane.f32.xlu0 %v791
  %v793 = vpop.xlane.xlu0 %792
  %v794 = vsel %vm94, %v568, 0.0
  %795 = vadd.xlane.f32.xlu0 %v794
  %v796 = vpop.xlane.xlu0 %795
  %v797 = vsel %vm94, %v569, 0.0
  %798 = vadd.xlane.f32.xlu0 %v797
  %v799 = vpop.xlane.xlu0 %798
  %v800 = vsel %vm94, %v570, 0.0
  %801 = vadd.xlane.f32.xlu0 %v800
  %v802 = vpop.xlane.xlu0 %801
  %v803 = vsel %vm94, %v571, 0.0
  %804 = vadd.xlane.f32.xlu0 %v803
  %v805 = vpop.xlane.xlu0 %804
  %v806 = vsel %vm94, %v572, 0.0
  %807 = vadd.xlane.f32.xlu0 %v806
  %v808 = vpop.xlane.xlu0 %807
  %v809 = vsel %vm94, %v573, 0.0
  %810 = vadd.xlane.f32.xlu0 %v809
  %v811 = vpop.xlane.xlu0 %810
  %v812 = vsel %vm94, %v574, 0.0
  %813 = vadd.xlane.f32.xlu0 %v812
  %v814 = vpop.xlane.xlu0 %813
  %v815 = vmul.f32 %v577, 0.020408163
  %v816 = vmul.f32 %v580, 0.020408163
  %v817 = vmul.f32 %v583, 0.020408163
  %v818 = vmul.f32 %v586, 0.020408163
  %v819 = vmul.f32 %v589, 0.020408163
  %v820 = vmul.f32 %v592, 0.020408163
  %v821 = vmul.f32 %v595, 0.020408163
  %v822 = vmul.f32 %v598, 0.020408163
  %v823 = vmul.f32 %v601, 0.020408163
  %v824 = vmul.f32 %v604, 0.020408163
  %v825 = vmul.f32 %v607, 0.020408163
  %v826 = vmul.f32 %v610, 0.020408163
  %v827 = vmul.f32 %v613, 0.020408163
  %v828 = vmul.f32 %v616, 0.020408163
  %v829 = vmul.f32 %v619, 0.020408163
  %v830 = vmul.f32 %v622, 0.020408163
  %v831 = vmul.f32 %v625, 0.020408163
  %v832 = vmul.f32 %v628, 0.020408163
  %v833 = vmul.f32 %v631, 0.020408163
  %v834 = vmul.f32 %v634, 0.020408163
  %v835 = vmul.f32 %v637, 0.020408163
  %v836 = vmul.f32 %v640, 0.020408163
  %v837 = vmul.f32 %v643, 0.020408163
  %v838 = vmul.f32 %v646, 0.020408163
  %v839 = vmul.f32 %v649, 0.020408163
  %v840 = vmul.f32 %v652, 0.020408163
  %v841 = vmul.f32 %v655, 0.020408163
  %v842 = vmul.f32 %v658, 0.020408163
  %v843 = vmul.f32 %v661, 0.020408163
  %v844 = vmul.f32 %v664, 0.020408163
  %v845 = vmul.f32 %v667, 0.020408163
  %v846 = vmul.f32 %v670, 0.020408163
  %v847 = vmul.f32 %v673, 0.020408163
  %v848 = vmul.f32 %v676, 0.020408163
  %v849 = vmul.f32 %v679, 0.020408163
  %v850 = vmul.f32 %v682, 0.020408163
  %v851 = vmul.f32 %v685, 0.020408163
  %v852 = vmul.f32 %v688, 0.020408163
  %v853 = vmul.f32 %v691, 0.020408163
  %v854 = vmul.f32 %v694, 0.020408163
  %v855 = vmul.f32 %v697, 0.020408163
  %v856 = vmul.f32 %v700, 0.020408163
  %v857 = vmul.f32 %v703, 0.020408163
  %v858 = vmul.f32 %v706, 0.020408163
  %v859 = vmul.f32 %v709, 0.020408163
  %v860 = vmul.f32 %v712, 0.020408163
  %v861 = vmul.f32 %v715, 0.020408163
  %v862 = vmul.f32 %v718, 0.020408163
  %v863 = vmul.f32 %v721, 0.020408163
  %v864 = vmul.f32 %v724, 0.020408163
  %v865 = vmul.f32 %v727, 0.020408163
  %v866 = vmul.f32 %v730, 0.020408163
  %v867 = vmul.f32 %v733, 0.020408163
  %v868 = vmul.f32 %v736, 0.020408163
  %v869 = vmul.f32 %v739, 0.020408163
  %v870 = vmul.f32 %v742, 0.020408163
  %v871 = vmul.f32 %v745, 0.020408163
  %v872 = vmul.f32 %v748, 0.020408163
  %v873 = vmul.f32 %v751, 0.020408163
  %v874 = vmul.f32 %v754, 0.020408163
  %v875 = vmul.f32 %v757, 0.020408163
  %v876 = vmul.f32 %v760, 0.020408163
  %v877 = vmul.f32 %v763, 0.020408163
  %v878 = vmul.f32 %v766, 0.020408163
  %v879 = vmul.f32 %v769, 0.020408163
  %v880 = vmul.f32 %v772, 0.020408163
  %v881 = vmul.f32 %v775, 0.020408163
  %v882 = vmul.f32 %v778, 0.020408163
  %v883 = vmul.f32 %v781, 0.020408163
  %v884 = vmul.f32 %v784, 0.020408163
  %v885 = vmul.f32 %v787, 0.020408163
  %v886 = vmul.f32 %v790, 0.020408163
  %v887 = vmul.f32 %v793, 0.020408163
  %v888 = vmul.f32 %v796, 0.020408163
  %v889 = vmul.f32 %v799, 0.020408163
  %v890 = vmul.f32 %v802, 0.020408163
  %v891 = vmul.f32 %v805, 0.020408163
  %v892 = vmul.f32 %v808, 0.020408163
  %v893 = vmul.f32 %v811, 0.020408163
  %v894 = vmul.f32 %v814, 0.020408163
  %v895 = vld [vmem:[%s1] sm:$0xff]
  %v896 = vld [vmem:[%s1 + $0x8] sm:$0xff]
  %v897 = vld [vmem:[%s1 + $0x10] sm:$0xff]
  %v898 = vld [vmem:[%s1 + $0x18] sm:$0xff]
  %v899 = vld [vmem:[%s1 + $0x20] sm:$0xff]
  %v900 = vld [vmem:[%s1 + $0x28] sm:$0xff]
  %v901 = vld [vmem:[%s1 + $0x30] sm:$0xff]
  %v902 = vld [vmem:[%s1 + $0x38] sm:$0xff]
  %v903 = vld [vmem:[%s1 + $0x40] sm:$0xff]
  %v904 = vld [vmem:[%s1 + $0x48] sm:$0xff]
  %v905 = vld [vmem:[%s1 + $0x50] sm:$0xff]
  %v906 = vld [vmem:[%s1 + $0x58] sm:$0xff]
  %v907 = vld [vmem:[%s1 + $0x60] sm:$0xff]
  %v908 = vld [vmem:[%s1 + $0x68] sm:$0xff]
  %v909 = vld [vmem:[%s1 + $0x70] sm:$0xff]
  %v910 = vld [vmem:[%s1 + $0x78] sm:$0xff]
  %v911 = vld [vmem:[%s1 + $0x80] sm:$0xff]
  %v912 = vld [vmem:[%s1 + $0x88] sm:$0xff]
  %v913 = vld [vmem:[%s1 + $0x90] sm:$0xff]
  %v914 = vld [vmem:[%s1 + $0x98] sm:$0xff]
  %v915 = vld [vmem:[%s1 + $0xa0] sm:$0xff]
  %v916 = vld [vmem:[%s1 + $0xa8] sm:$0xff]
  %v917 = vld [vmem:[%s1 + $0xb0] sm:$0xff]
  %v918 = vld [vmem:[%s1 + $0xb8] sm:$0xff]
  %v919 = vld [vmem:[%s1 + $0xc0] sm:$0xff]
  %v920 = vld [vmem:[%s1 + $0xc8] sm:$0xff]
  %v921 = vld [vmem:[%s1 + $0xd0] sm:$0xff]
  %v922 = vld [vmem:[%s1 + $0xd8] sm:$0xff]
  %v923 = vld [vmem:[%s1 + $0xe0] sm:$0xff]
  %v924 = vld [vmem:[%s1 + $0xe8] sm:$0xff]
  %v925 = vld [vmem:[%s1 + $0xf0] sm:$0xff]
  %v926 = vld [vmem:[%s1 + $0xf8] sm:$0xff]
  %v927 = vld [vmem:[%s1 + $0x100] sm:$0xff]
  %v928 = vld [vmem:[%s1 + $0x108] sm:$0xff]
  %v929 = vld [vmem:[%s1 + $0x110] sm:$0xff]
  %v930 = vld [vmem:[%s1 + $0x118] sm:$0xff]
  %v931 = vld [vmem:[%s1 + $0x120] sm:$0xff]
  %v932 = vld [vmem:[%s1 + $0x128] sm:$0xff]
  %v933 = vld [vmem:[%s1 + $0x130] sm:$0xff]
  %v934 = vld [vmem:[%s1 + $0x138] sm:$0xff]
  %v935 = vld [vmem:[%s1 + $0x140] sm:$0xff]
  %v936 = vld [vmem:[%s1 + $0x148] sm:$0xff]
  %v937 = vld [vmem:[%s1 + $0x150] sm:$0xff]
  %v938 = vld [vmem:[%s1 + $0x158] sm:$0xff]
  %v939 = vld [vmem:[%s1 + $0x160] sm:$0xff]
  %v940 = vld [vmem:[%s1 + $0x168] sm:$0xff]
  %v941 = vld [vmem:[%s1 + $0x170] sm:$0xff]
  %v942 = vld [vmem:[%s1 + $0x178] sm:$0xff]
  %v943 = vld [vmem:[%s1 + $0x180] sm:$0xff]
  %v944 = vld [vmem:[%s1 + $0x188] sm:$0xff]
  %v945 = vld [vmem:[%s1 + $0x190] sm:$0xff]
  %v946 = vld [vmem:[%s1 + $0x198] sm:$0xff]
  %v947 = vld [vmem:[%s1 + $0x1a0] sm:$0xff]
  %v948 = vld [vmem:[%s1 + $0x1a8] sm:$0xff]
  %v949 = vld [vmem:[%s1 + $0x1b0] sm:$0xff]
  %v950 = vld [vmem:[%s1 + $0x1b8] sm:$0xff]
  %v951 = vld [vmem:[%s1 + $0x1c0] sm:$0xff]
  %v952 = vld [vmem:[%s1 + $0x1c8] sm:$0xff]
  %v953 = vld [vmem:[%s1 + $0x1d0] sm:$0xff]
  %v954 = vld [vmem:[%s1 + $0x1d8] sm:$0xff]
  %v955 = vld [vmem:[%s1 + $0x1e0] sm:$0xff]
  %v956 = vld [vmem:[%s1 + $0x1e8] sm:$0xff]
  %v957 = vld [vmem:[%s1 + $0x1f0] sm:$0xff]
  %v958 = vld [vmem:[%s1 + $0x1f8] sm:$0xff]
  %v959 = vld [vmem:[%s1 + $0x200] sm:$0xff]
  %v960 = vld [vmem:[%s1 + $0x208] sm:$0xff]
  %v961 = vld [vmem:[%s1 + $0x210] sm:$0xff]
  %v962 = vld [vmem:[%s1 + $0x218] sm:$0xff]
  %v963 = vld [vmem:[%s1 + $0x220] sm:$0xff]
  %v964 = vld [vmem:[%s1 + $0x228] sm:$0xff]
  %v965 = vld [vmem:[%s1 + $0x230] sm:$0xff]
  %v966 = vld [vmem:[%s1 + $0x238] sm:$0xff]
  %v967 = vld [vmem:[%s1 + $0x240] sm:$0xff]
  %v968 = vld [vmem:[%s1 + $0x248] sm:$0xff]
  %v969 = vld [vmem:[%s1 + $0x250] sm:$0xff]
  %v970 = vld [vmem:[%s1 + $0x258] sm:$0xff]
  %v971 = vld [vmem:[%s1 + $0x260] sm:$0xff]
  %v972 = vld [vmem:[%s1 + $0x268] sm:$0xff]
  %v973 = vld [vmem:[%s1 + $0x270] sm:$0xff]
  %v974 = vld [vmem:[%s1 + $0x278] sm:$0xff]
  %v975 = vld [vmem:[%s2] sm:$0xff]
  %v976 = vld [vmem:[%s2 + $0x8] sm:$0xff]
  %v977 = vld [vmem:[%s2 + $0x10] sm:$0xff]
  %v978 = vld [vmem:[%s2 + $0x18] sm:$0xff]
  %v979 = vld [vmem:[%s2 + $0x20] sm:$0xff]
  %v980 = vld [vmem:[%s2 + $0x28] sm:$0xff]
  %v981 = vld [vmem:[%s2 + $0x30] sm:$0xff]
  %v982 = vld [vmem:[%s2 + $0x38] sm:$0xff]
  %v983 = vld [vmem:[%s2 + $0x40] sm:$0xff]
  %v984 = vld [vmem:[%s2 + $0x48] sm:$0xff]
  %v985 = vld [vmem:[%s2 + $0x50] sm:$0xff]
  %v986 = vld [vmem:[%s2 + $0x58] sm:$0xff]
  %v987 = vld [vmem:[%s2 + $0x60] sm:$0xff]
  %v988 = vld [vmem:[%s2 + $0x68] sm:$0xff]
  %v989 = vld [vmem:[%s2 + $0x70] sm:$0xff]
  %v990 = vld [vmem:[%s2 + $0x78] sm:$0xff]
  %v991 = vld [vmem:[%s2 + $0x80] sm:$0xff]
  %v992 = vld [vmem:[%s2 + $0x88] sm:$0xff]
  %v993 = vld [vmem:[%s2 + $0x90] sm:$0xff]
  %v994 = vld [vmem:[%s2 + $0x98] sm:$0xff]
  %v995 = vld [vmem:[%s2 + $0xa0] sm:$0xff]
  %v996 = vld [vmem:[%s2 + $0xa8] sm:$0xff]
  %v997 = vld [vmem:[%s2 + $0xb0] sm:$0xff]
  %v998 = vld [vmem:[%s2 + $0xb8] sm:$0xff]
  %v999 = vld [vmem:[%s2 + $0xc0] sm:$0xff]
  %v1000 = vld [vmem:[%s2 + $0xc8] sm:$0xff]
  %v1001 = vld [vmem:[%s2 + $0xd0] sm:$0xff]
  %v1002 = vld [vmem:[%s2 + $0xd8] sm:$0xff]
  %v1003 = vld [vmem:[%s2 + $0xe0] sm:$0xff]
  %v1004 = vld [vmem:[%s2 + $0xe8] sm:$0xff]
  %v1005 = vld [vmem:[%s2 + $0xf0] sm:$0xff]
  %v1006 = vld [vmem:[%s2 + $0xf8] sm:$0xff]
  %v1007 = vld [vmem:[%s2 + $0x100] sm:$0xff]
  %v1008 = vld [vmem:[%s2 + $0x108] sm:$0xff]
  %v1009 = vld [vmem:[%s2 + $0x110] sm:$0xff]
  %v1010 = vld [vmem:[%s2 + $0x118] sm:$0xff]
  %v1011 = vld [vmem:[%s2 + $0x120] sm:$0xff]
  %v1012 = vld [vmem:[%s2 + $0x128] sm:$0xff]
  %v1013 = vld [vmem:[%s2 + $0x130] sm:$0xff]
  %v1014 = vld [vmem:[%s2 + $0x138] sm:$0xff]
  %v1015 = vld [vmem:[%s2 + $0x140] sm:$0xff]
  %v1016 = vld [vmem:[%s2 + $0x148] sm:$0xff]
  %v1017 = vld [vmem:[%s2 + $0x150] sm:$0xff]
  %v1018 = vld [vmem:[%s2 + $0x158] sm:$0xff]
  %v1019 = vld [vmem:[%s2 + $0x160] sm:$0xff]
  %v1020 = vld [vmem:[%s2 + $0x168] sm:$0xff]
  %v1021 = vld [vmem:[%s2 + $0x170] sm:$0xff]
  %v1022 = vld [vmem:[%s2 + $0x178] sm:$0xff]
  %v1023 = vld [vmem:[%s2 + $0x180] sm:$0xff]
  %v1024 = vld [vmem:[%s2 + $0x188] sm:$0xff]
  %v1025 = vld [vmem:[%s2 + $0x190] sm:$0xff]
  %v1026 = vld [vmem:[%s2 + $0x198] sm:$0xff]
  %v1027 = vld [vmem:[%s2 + $0x1a0] sm:$0xff]
  %v1028 = vld [vmem:[%s2 + $0x1a8] sm:$0xff]
  %v1029 = vld [vmem:[%s2 + $0x1b0] sm:$0xff]
  %v1030 = vld [vmem:[%s2 + $0x1b8] sm:$0xff]
  %v1031 = vld [vmem:[%s2 + $0x1c0] sm:$0xff]
  %v1032 = vld [vmem:[%s2 + $0x1c8] sm:$0xff]
  %v1033 = vld [vmem:[%s2 + $0x1d0] sm:$0xff]
  %v1034 = vld [vmem:[%s2 + $0x1d8] sm:$0xff]
  %v1035 = vld [vmem:[%s2 + $0x1e0] sm:$0xff]
  %v1036 = vld [vmem:[%s2 + $0x1e8] sm:$0xff]
  %v1037 = vld [vmem:[%s2 + $0x1f0] sm:$0xff]
  %v1038 = vld [vmem:[%s2 + $0x1f8] sm:$0xff]
  %v1039 = vld [vmem:[%s2 + $0x200] sm:$0xff]
  %v1040 = vld [vmem:[%s2 + $0x208] sm:$0xff]
  %v1041 = vld [vmem:[%s2 + $0x210] sm:$0xff]
  %v1042 = vld [vmem:[%s2 + $0x218] sm:$0xff]
  %v1043 = vld [vmem:[%s2 + $0x220] sm:$0xff]
  %v1044 = vld [vmem:[%s2 + $0x228] sm:$0xff]
  %v1045 = vld [vmem:[%s2 + $0x230] sm:$0xff]
  %v1046 = vld [vmem:[%s2 + $0x238] sm:$0xff]
  %v1047 = vld [vmem:[%s2 + $0x240] sm:$0xff]
  %v1048 = vld [vmem:[%s2 + $0x248] sm:$0xff]
  %v1049 = vld [vmem:[%s2 + $0x250] sm:$0xff]
  %v1050 = vld [vmem:[%s2 + $0x258] sm:$0xff]
  %v1051 = vld [vmem:[%s2 + $0x260] sm:$0xff]
  %v1052 = vld [vmem:[%s2 + $0x268] sm:$0xff]
  %v1053 = vld [vmem:[%s2 + $0x270] sm:$0xff]
  %v1054 = vld [vmem:[%s2 + $0x278] sm:$0xff]
  %v1055 = vadd.f32 %v815, 0.001
  %v1056 = vadd.f32 %v816, 0.001
  %v1057 = vadd.f32 %v817, 0.001
  %v1058 = vadd.f32 %v818, 0.001
  %v1059 = vadd.f32 %v819, 0.001
  %v1060 = vadd.f32 %v820, 0.001
  %v1061 = vadd.f32 %v821, 0.001
  %v1062 = vadd.f32 %v822, 0.001
  %v1063 = vadd.f32 %v823, 0.001
  %v1064 = vadd.f32 %v824, 0.001
  %v1065 = vadd.f32 %v825, 0.001
  %v1066 = vadd.f32 %v826, 0.001
  %v1067 = vadd.f32 %v827, 0.001
  %v1068 = vadd.f32 %v828, 0.001
  %v1069 = vadd.f32 %v829, 0.001
  %v1070 = vadd.f32 %v830, 0.001
  %v1071 = vadd.f32 %v831, 0.001
  %v1072 = vadd.f32 %v832, 0.001
  %v1073 = vadd.f32 %v833, 0.001
  %v1074 = vadd.f32 %v834, 0.001
  %v1075 = vadd.f32 %v835, 0.001
  %v1076 = vadd.f32 %v836, 0.001
  %v1077 = vadd.f32 %v837, 0.001
  %v1078 = vadd.f32 %v838, 0.001
  %v1079 = vadd.f32 %v839, 0.001
  %v1080 = vadd.f32 %v840, 0.001
  %v1081 = vadd.f32 %v841, 0.001
  %v1082 = vadd.f32 %v842, 0.001
  %v1083 = vadd.f32 %v843, 0.001
  %v1084 = vadd.f32 %v844, 0.001
  %v1085 = vadd.f32 %v845, 0.001
  %v1086 = vadd.f32 %v846, 0.001
  %v1087 = vadd.f32 %v847, 0.001
  %v1088 = vadd.f32 %v848, 0.001
  %v1089 = vadd.f32 %v849, 0.001
  %v1090 = vadd.f32 %v850, 0.001
  %v1091 = vadd.f32 %v851, 0.001
  %v1092 = vadd.f32 %v852, 0.001
  %v1093 = vadd.f32 %v853, 0.001
  %v1094 = vadd.f32 %v854, 0.001
  %v1095 = vadd.f32 %v855, 0.001
  %v1096 = vadd.f32 %v856, 0.001
  %v1097 = vadd.f32 %v857, 0.001
  %v1098 = vadd.f32 %v858, 0.001
  %v1099 = vadd.f32 %v859, 0.001
  %v1100 = vadd.f32 %v860, 0.001
  %v1101 = vadd.f32 %v861, 0.001
  %v1102 = vadd.f32 %v862, 0.001
  %v1103 = vadd.f32 %v863, 0.001
  %v1104 = vadd.f32 %v864, 0.001
  %v1105 = vadd.f32 %v865, 0.001
  %v1106 = vadd.f32 %v866, 0.001
  %v1107 = vadd.f32 %v867, 0.001
  %v1108 = vadd.f32 %v868, 0.001
  %v1109 = vadd.f32 %v869, 0.001
  %v1110 = vadd.f32 %v870, 0.001
  %v1111 = vadd.f32 %v871, 0.001
  %v1112 = vadd.f32 %v872, 0.001
  %v1113 = vadd.f32 %v873, 0.001
  %v1114 = vadd.f32 %v874, 0.001
  %v1115 = vadd.f32 %v875, 0.001
  %v1116 = vadd.f32 %v876, 0.001
  %v1117 = vadd.f32 %v877, 0.001
  %v1118 = vadd.f32 %v878, 0.001
  %v1119 = vadd.f32 %v879, 0.001
  %v1120 = vadd.f32 %v880, 0.001
  %v1121 = vadd.f32 %v881, 0.001
  %v1122 = vadd.f32 %v882, 0.001
  %v1123 = vadd.f32 %v883, 0.001
  %v1124 = vadd.f32 %v884, 0.001
  %v1125 = vadd.f32 %v885, 0.001
  %v1126 = vadd.f32 %v886, 0.001
  %v1127 = vadd.f32 %v887, 0.001
  %v1128 = vadd.f32 %v888, 0.001
  %v1129 = vadd.f32 %v889, 0.001
  %v1130 = vadd.f32 %v890, 0.001
  %v1131 = vadd.f32 %v891, 0.001
  %v1132 = vadd.f32 %v892, 0.001
  %v1133 = vadd.f32 %v893, 0.001
  %v1134 = vadd.f32 %v894, 0.001
  %v1135 = vrsqrt.pop %v1055
  %v1136 = vmul.f32 %v1135, %v1055
  %v1137 = vmul.f32 %v1136, %v1135
  %v1138 = vmul.f32 0.5, %v1137
  %v1139 = vsub.f32 1.5, %v1138
  %v1140 = vmul.f32 %v1135, %v1139
  %vm1141 = vweird.f32 %v1055
  %vm1142 = vweird.f32 %v1135
  %vm1143 = vmor %vm1141, %vm1142
  %v1144 = vsel %vm1143, %v1135, %v1140
  %v1145 = vrsqrt.pop %v1056
  %v1146 = vmul.f32 %v1145, %v1056
  %v1147 = vmul.f32 %v1146, %v1145
  %v1148 = vmul.f32 0.5, %v1147
  %v1149 = vsub.f32 1.5, %v1148
  %v1150 = vmul.f32 %v1145, %v1149
  %vm1151 = vweird.f32 %v1056
  %vm1152 = vweird.f32 %v1145
  %vm1153 = vmor %vm1151, %vm1152
  %v1154 = vsel %vm1153, %v1145, %v1150
  %v1155 = vrsqrt.pop %v1057
  %v1156 = vmul.f32 %v1155, %v1057
  %v1157 = vmul.f32 %v1156, %v1155
  %v1158 = vmul.f32 0.5, %v1157
  %v1159 = vsub.f32 1.5, %v1158
  %v1160 = vmul.f32 %v1155, %v1159
  %vm1161 = vweird.f32 %v1057
  %vm1162 = vweird.f32 %v1155
  %vm1163 = vmor %vm1161, %vm1162
  %v1164 = vsel %vm1163, %v1155, %v1160
  %v1165 = vrsqrt.pop %v1058
  %v1166 = vmul.f32 %v1165, %v1058
  %v1167 = vmul.f32 %v1166, %v1165
  %v1168 = vmul.f32 0.5, %v1167
  %v1169 = vsub.f32 1.5, %v1168
  %v1170 = vmul.f32 %v1165, %v1169
  %vm1171 = vweird.f32 %v1058
  %vm1172 = vweird.f32 %v1165
  %vm1173 = vmor %vm1171, %vm1172
  %v1174 = vsel %vm1173, %v1165, %v1170
  %v1175 = vrsqrt.pop %v1059
  %v1176 = vmul.f32 %v1175, %v1059
  %v1177 = vmul.f32 %v1176, %v1175
  %v1178 = vmul.f32 0.5, %v1177
  %v1179 = vsub.f32 1.5, %v1178
  %v1180 = vmul.f32 %v1175, %v1179
  %vm1181 = vweird.f32 %v1059
  %vm1182 = vweird.f32 %v1175
  %vm1183 = vmor %vm1181, %vm1182
  %v1184 = vsel %vm1183, %v1175, %v1180
  %v1185 = vrsqrt.pop %v1060
  %v1186 = vmul.f32 %v1185, %v1060
  %v1187 = vmul.f32 %v1186, %v1185
  %v1188 = vmul.f32 0.5, %v1187
  %v1189 = vsub.f32 1.5, %v1188
  %v1190 = vmul.f32 %v1185, %v1189
  %vm1191 = vweird.f32 %v1060
  %vm1192 = vweird.f32 %v1185
  %vm1193 = vmor %vm1191, %vm1192
  %v1194 = vsel %vm1193, %v1185, %v1190
  %v1195 = vrsqrt.pop %v1061
  %v1196 = vmul.f32 %v1195, %v1061
  %v1197 = vmul.f32 %v1196, %v1195
  %v1198 = vmul.f32 0.5, %v1197
  %v1199 = vsub.f32 1.5, %v1198
  %v1200 = vmul.f32 %v1195, %v1199
  %vm1201 = vweird.f32 %v1061
  %vm1202 = vweird.f32 %v1195
  %vm1203 = vmor %vm1201, %vm1202
  %v1204 = vsel %vm1203, %v1195, %v1200
  %v1205 = vrsqrt.pop %v1062
  %v1206 = vmul.f32 %v1205, %v1062
  %v1207 = vmul.f32 %v1206, %v1205
  %v1208 = vmul.f32 0.5, %v1207
  %v1209 = vsub.f32 1.5, %v1208
  %v1210 = vmul.f32 %v1205, %v1209
  %vm1211 = vweird.f32 %v1062
  %vm1212 = vweird.f32 %v1205
  %vm1213 = vmor %vm1211, %vm1212
  %v1214 = vsel %vm1213, %v1205, %v1210
  %v1215 = vrsqrt.pop %v1063
  %v1216 = vmul.f32 %v1215, %v1063
  %v1217 = vmul.f32 %v1216, %v1215
  %v1218 = vmul.f32 0.5, %v1217
  %v1219 = vsub.f32 1.5, %v1218
  %v1220 = vmul.f32 %v1215, %v1219
  %vm1221 = vweird.f32 %v1063
  %vm1222 = vweird.f32 %v1215
  %vm1223 = vmor %vm1221, %vm1222
  %v1224 = vsel %vm1223, %v1215, %v1220
  %v1225 = vrsqrt.pop %v1064
  %v1226 = vmul.f32 %v1225, %v1064
  %v1227 = vmul.f32 %v1226, %v1225
  %v1228 = vmul.f32 0.5, %v1227
  %v1229 = vsub.f32 1.5, %v1228
  %v1230 = vmul.f32 %v1225, %v1229
  %vm1231 = vweird.f32 %v1064
  %vm1232 = vweird.f32 %v1225
  %vm1233 = vmor %vm1231, %vm1232
  %v1234 = vsel %vm1233, %v1225, %v1230
  %v1235 = vrsqrt.pop %v1065
  %v1236 = vmul.f32 %v1235, %v1065
  %v1237 = vmul.f32 %v1236, %v1235
  %v1238 = vmul.f32 0.5, %v1237
  %v1239 = vsub.f32 1.5, %v1238
  %v1240 = vmul.f32 %v1235, %v1239
  %vm1241 = vweird.f32 %v1065
  %vm1242 = vweird.f32 %v1235
  %vm1243 = vmor %vm1241, %vm1242
  %v1244 = vsel %vm1243, %v1235, %v1240
  %v1245 = vrsqrt.pop %v1066
  %v1246 = vmul.f32 %v1245, %v1066
  %v1247 = vmul.f32 %v1246, %v1245
  %v1248 = vmul.f32 0.5, %v1247
  %v1249 = vsub.f32 1.5, %v1248
  %v1250 = vmul.f32 %v1245, %v1249
  %vm1251 = vweird.f32 %v1066
  %vm1252 = vweird.f32 %v1245
  %vm1253 = vmor %vm1251, %vm1252
  %v1254 = vsel %vm1253, %v1245, %v1250
  %v1255 = vrsqrt.pop %v1067
  %v1256 = vmul.f32 %v1255, %v1067
  %v1257 = vmul.f32 %v1256, %v1255
  %v1258 = vmul.f32 0.5, %v1257
  %v1259 = vsub.f32 1.5, %v1258
  %v1260 = vmul.f32 %v1255, %v1259
  %vm1261 = vweird.f32 %v1067
  %vm1262 = vweird.f32 %v1255
  %vm1263 = vmor %vm1261, %vm1262
  %v1264 = vsel %vm1263, %v1255, %v1260
  %v1265 = vrsqrt.pop %v1068
  %v1266 = vmul.f32 %v1265, %v1068
  %v1267 = vmul.f32 %v1266, %v1265
  %v1268 = vmul.f32 0.5, %v1267
  %v1269 = vsub.f32 1.5, %v1268
  %v1270 = vmul.f32 %v1265, %v1269
  %vm1271 = vweird.f32 %v1068
  %vm1272 = vweird.f32 %v1265
  %vm1273 = vmor %vm1271, %vm1272
  %v1274 = vsel %vm1273, %v1265, %v1270
  %v1275 = vrsqrt.pop %v1069
  %v1276 = vmul.f32 %v1275, %v1069
  %v1277 = vmul.f32 %v1276, %v1275
  %v1278 = vmul.f32 0.5, %v1277
  %v1279 = vsub.f32 1.5, %v1278
  %v1280 = vmul.f32 %v1275, %v1279
  %vm1281 = vweird.f32 %v1069
  %vm1282 = vweird.f32 %v1275
  %vm1283 = vmor %vm1281, %vm1282
  %v1284 = vsel %vm1283, %v1275, %v1280
  %v1285 = vrsqrt.pop %v1070
  %v1286 = vmul.f32 %v1285, %v1070
  %v1287 = vmul.f32 %v1286, %v1285
  %v1288 = vmul.f32 0.5, %v1287
  %v1289 = vsub.f32 1.5, %v1288
  %v1290 = vmul.f32 %v1285, %v1289
  %vm1291 = vweird.f32 %v1070
  %vm1292 = vweird.f32 %v1285
  %vm1293 = vmor %vm1291, %vm1292
  %v1294 = vsel %vm1293, %v1285, %v1290
  %v1295 = vrsqrt.pop %v1071
  %v1296 = vmul.f32 %v1295, %v1071
  %v1297 = vmul.f32 %v1296, %v1295
  %v1298 = vmul.f32 0.5, %v1297
  %v1299 = vsub.f32 1.5, %v1298
  %v1300 = vmul.f32 %v1295, %v1299
  %vm1301 = vweird.f32 %v1071
  %vm1302 = vweird.f32 %v1295
  %vm1303 = vmor %vm1301, %vm1302
  %v1304 = vsel %vm1303, %v1295, %v1300
  %v1305 = vrsqrt.pop %v1072
  %v1306 = vmul.f32 %v1305, %v1072
  %v1307 = vmul.f32 %v1306, %v1305
  %v1308 = vmul.f32 0.5, %v1307
  %v1309 = vsub.f32 1.5, %v1308
  %v1310 = vmul.f32 %v1305, %v1309
  %vm1311 = vweird.f32 %v1072
  %vm1312 = vweird.f32 %v1305
  %vm1313 = vmor %vm1311, %vm1312
  %v1314 = vsel %vm1313, %v1305, %v1310
  %v1315 = vrsqrt.pop %v1073
  %v1316 = vmul.f32 %v1315, %v1073
  %v1317 = vmul.f32 %v1316, %v1315
  %v1318 = vmul.f32 0.5, %v1317
  %v1319 = vsub.f32 1.5, %v1318
  %v1320 = vmul.f32 %v1315, %v1319
  %vm1321 = vweird.f32 %v1073
  %vm1322 = vweird.f32 %v1315
  %vm1323 = vmor %vm1321, %vm1322
  %v1324 = vsel %vm1323, %v1315, %v1320
  %v1325 = vrsqrt.pop %v1074
  %v1326 = vmul.f32 %v1325, %v1074
  %v1327 = vmul.f32 %v1326, %v1325
  %v1328 = vmul.f32 0.5, %v1327
  %v1329 = vsub.f32 1.5, %v1328
  %v1330 = vmul.f32 %v1325, %v1329
  %vm1331 = vweird.f32 %v1074
  %vm1332 = vweird.f32 %v1325
  %vm1333 = vmor %vm1331, %vm1332
  %v1334 = vsel %vm1333, %v1325, %v1330
  %v1335 = vrsqrt.pop %v1075
  %v1336 = vmul.f32 %v1335, %v1075
  %v1337 = vmul.f32 %v1336, %v1335
  %v1338 = vmul.f32 0.5, %v1337
  %v1339 = vsub.f32 1.5, %v1338
  %v1340 = vmul.f32 %v1335, %v1339
  %vm1341 = vweird.f32 %v1075
  %vm1342 = vweird.f32 %v1335
  %vm1343 = vmor %vm1341, %vm1342
  %v1344 = vsel %vm1343, %v1335, %v1340
  %v1345 = vrsqrt.pop %v1076
  %v1346 = vmul.f32 %v1345, %v1076
  %v1347 = vmul.f32 %v1346, %v1345
  %v1348 = vmul.f32 0.5, %v1347
  %v1349 = vsub.f32 1.5, %v1348
  %v1350 = vmul.f32 %v1345, %v1349
  %vm1351 = vweird.f32 %v1076
  %vm1352 = vweird.f32 %v1345
  %vm1353 = vmor %vm1351, %vm1352
  %v1354 = vsel %vm1353, %v1345, %v1350
  %v1355 = vrsqrt.pop %v1077
  %v1356 = vmul.f32 %v1355, %v1077
  %v1357 = vmul.f32 %v1356, %v1355
  %v1358 = vmul.f32 0.5, %v1357
  %v1359 = vsub.f32 1.5, %v1358
  %v1360 = vmul.f32 %v1355, %v1359
  %vm1361 = vweird.f32 %v1077
  %vm1362 = vweird.f32 %v1355
  %vm1363 = vmor %vm1361, %vm1362
  %v1364 = vsel %vm1363, %v1355, %v1360
  %v1365 = vrsqrt.pop %v1078
  %v1366 = vmul.f32 %v1365, %v1078
  %v1367 = vmul.f32 %v1366, %v1365
  %v1368 = vmul.f32 0.5, %v1367
  %v1369 = vsub.f32 1.5, %v1368
  %v1370 = vmul.f32 %v1365, %v1369
  %vm1371 = vweird.f32 %v1078
  %vm1372 = vweird.f32 %v1365
  %vm1373 = vmor %vm1371, %vm1372
  %v1374 = vsel %vm1373, %v1365, %v1370
  %v1375 = vrsqrt.pop %v1079
  %v1376 = vmul.f32 %v1375, %v1079
  %v1377 = vmul.f32 %v1376, %v1375
  %v1378 = vmul.f32 0.5, %v1377
  %v1379 = vsub.f32 1.5, %v1378
  %v1380 = vmul.f32 %v1375, %v1379
  %vm1381 = vweird.f32 %v1079
  %vm1382 = vweird.f32 %v1375
  %vm1383 = vmor %vm1381, %vm1382
  %v1384 = vsel %vm1383, %v1375, %v1380
  %v1385 = vrsqrt.pop %v1080
  %v1386 = vmul.f32 %v1385, %v1080
  %v1387 = vmul.f32 %v1386, %v1385
  %v1388 = vmul.f32 0.5, %v1387
  %v1389 = vsub.f32 1.5, %v1388
  %v1390 = vmul.f32 %v1385, %v1389
  %vm1391 = vweird.f32 %v1080
  %vm1392 = vweird.f32 %v1385
  %vm1393 = vmor %vm1391, %vm1392
  %v1394 = vsel %vm1393, %v1385, %v1390
  %v1395 = vrsqrt.pop %v1081
  %v1396 = vmul.f32 %v1395, %v1081
  %v1397 = vmul.f32 %v1396, %v1395
  %v1398 = vmul.f32 0.5, %v1397
  %v1399 = vsub.f32 1.5, %v1398
  %v1400 = vmul.f32 %v1395, %v1399
  %vm1401 = vweird.f32 %v1081
  %vm1402 = vweird.f32 %v1395
  %vm1403 = vmor %vm1401, %vm1402
  %v1404 = vsel %vm1403, %v1395, %v1400
  %v1405 = vrsqrt.pop %v1082
  %v1406 = vmul.f32 %v1405, %v1082
  %v1407 = vmul.f32 %v1406, %v1405
  %v1408 = vmul.f32 0.5, %v1407
  %v1409 = vsub.f32 1.5, %v1408
  %v1410 = vmul.f32 %v1405, %v1409
  %vm1411 = vweird.f32 %v1082
  %vm1412 = vweird.f32 %v1405
  %vm1413 = vmor %vm1411, %vm1412
  %v1414 = vsel %vm1413, %v1405, %v1410
  %v1415 = vrsqrt.pop %v1083
  %v1416 = vmul.f32 %v1415, %v1083
  %v1417 = vmul.f32 %v1416, %v1415
  %v1418 = vmul.f32 0.5, %v1417
  %v1419 = vsub.f32 1.5, %v1418
  %v1420 = vmul.f32 %v1415, %v1419
  %vm1421 = vweird.f32 %v1083
  %vm1422 = vweird.f32 %v1415
  %vm1423 = vmor %vm1421, %vm1422
  %v1424 = vsel %vm1423, %v1415, %v1420
  %v1425 = vrsqrt.pop %v1084
  %v1426 = vmul.f32 %v1425, %v1084
  %v1427 = vmul.f32 %v1426, %v1425
  %v1428 = vmul.f32 0.5, %v1427
  %v1429 = vsub.f32 1.5, %v1428
  %v1430 = vmul.f32 %v1425, %v1429
  %vm1431 = vweird.f32 %v1084
  %vm1432 = vweird.f32 %v1425
  %vm1433 = vmor %vm1431, %vm1432
  %v1434 = vsel %vm1433, %v1425, %v1430
  %v1435 = vrsqrt.pop %v1085
  %v1436 = vmul.f32 %v1435, %v1085
  %v1437 = vmul.f32 %v1436, %v1435
  %v1438 = vmul.f32 0.5, %v1437
  %v1439 = vsub.f32 1.5, %v1438
  %v1440 = vmul.f32 %v1435, %v1439
  %vm1441 = vweird.f32 %v1085
  %vm1442 = vweird.f32 %v1435
  %vm1443 = vmor %vm1441, %vm1442
  %v1444 = vsel %vm1443, %v1435, %v1440
  %v1445 = vrsqrt.pop %v1086
  %v1446 = vmul.f32 %v1445, %v1086
  %v1447 = vmul.f32 %v1446, %v1445
  %v1448 = vmul.f32 0.5, %v1447
  %v1449 = vsub.f32 1.5, %v1448
  %v1450 = vmul.f32 %v1445, %v1449
  %vm1451 = vweird.f32 %v1086
  %vm1452 = vweird.f32 %v1445
  %vm1453 = vmor %vm1451, %vm1452
  %v1454 = vsel %vm1453, %v1445, %v1450
  %v1455 = vrsqrt.pop %v1087
  %v1456 = vmul.f32 %v1455, %v1087
  %v1457 = vmul.f32 %v1456, %v1455
  %v1458 = vmul.f32 0.5, %v1457
  %v1459 = vsub.f32 1.5, %v1458
  %v1460 = vmul.f32 %v1455, %v1459
  %vm1461 = vweird.f32 %v1087
  %vm1462 = vweird.f32 %v1455
  %vm1463 = vmor %vm1461, %vm1462
  %v1464 = vsel %vm1463, %v1455, %v1460
  %v1465 = vrsqrt.pop %v1088
  %v1466 = vmul.f32 %v1465, %v1088
  %v1467 = vmul.f32 %v1466, %v1465
  %v1468 = vmul.f32 0.5, %v1467
  %v1469 = vsub.f32 1.5, %v1468
  %v1470 = vmul.f32 %v1465, %v1469
  %vm1471 = vweird.f32 %v1088
  %vm1472 = vweird.f32 %v1465
  %vm1473 = vmor %vm1471, %vm1472
  %v1474 = vsel %vm1473, %v1465, %v1470
  %v1475 = vrsqrt.pop %v1089
  %v1476 = vmul.f32 %v1475, %v1089
  %v1477 = vmul.f32 %v1476, %v1475
  %v1478 = vmul.f32 0.5, %v1477
  %v1479 = vsub.f32 1.5, %v1478
  %v1480 = vmul.f32 %v1475, %v1479
  %vm1481 = vweird.f32 %v1089
  %vm1482 = vweird.f32 %v1475
  %vm1483 = vmor %vm1481, %vm1482
  %v1484 = vsel %vm1483, %v1475, %v1480
  %v1485 = vrsqrt.pop %v1090
  %v1486 = vmul.f32 %v1485, %v1090
  %v1487 = vmul.f32 %v1486, %v1485
  %v1488 = vmul.f32 0.5, %v1487
  %v1489 = vsub.f32 1.5, %v1488
  %v1490 = vmul.f32 %v1485, %v1489
  %vm1491 = vweird.f32 %v1090
  %vm1492 = vweird.f32 %v1485
  %vm1493 = vmor %vm1491, %vm1492
  %v1494 = vsel %vm1493, %v1485, %v1490
  %v1495 = vrsqrt.pop %v1091
  %v1496 = vmul.f32 %v1495, %v1091
  %v1497 = vmul.f32 %v1496, %v1495
  %v1498 = vmul.f32 0.5, %v1497
  %v1499 = vsub.f32 1.5, %v1498
  %v1500 = vmul.f32 %v1495, %v1499
  %vm1501 = vweird.f32 %v1091
  %vm1502 = vweird.f32 %v1495
  %vm1503 = vmor %vm1501, %vm1502
  %v1504 = vsel %vm1503, %v1495, %v1500
  %v1505 = vrsqrt.pop %v1092
  %v1506 = vmul.f32 %v1505, %v1092
  %v1507 = vmul.f32 %v1506, %v1505
  %v1508 = vmul.f32 0.5, %v1507
  %v1509 = vsub.f32 1.5, %v1508
  %v1510 = vmul.f32 %v1505, %v1509
  %vm1511 = vweird.f32 %v1092
  %vm1512 = vweird.f32 %v1505
  %vm1513 = vmor %vm1511, %vm1512
  %v1514 = vsel %vm1513, %v1505, %v1510
  %v1515 = vrsqrt.pop %v1093
  %v1516 = vmul.f32 %v1515, %v1093
  %v1517 = vmul.f32 %v1516, %v1515
  %v1518 = vmul.f32 0.5, %v1517
  %v1519 = vsub.f32 1.5, %v1518
  %v1520 = vmul.f32 %v1515, %v1519
  %vm1521 = vweird.f32 %v1093
  %vm1522 = vweird.f32 %v1515
  %vm1523 = vmor %vm1521, %vm1522
  %v1524 = vsel %vm1523, %v1515, %v1520
  %v1525 = vrsqrt.pop %v1094
  %v1526 = vmul.f32 %v1525, %v1094
  %v1527 = vmul.f32 %v1526, %v1525
  %v1528 = vmul.f32 0.5, %v1527
  %v1529 = vsub.f32 1.5, %v1528
  %v1530 = vmul.f32 %v1525, %v1529
  %vm1531 = vweird.f32 %v1094
  %vm1532 = vweird.f32 %v1525
  %vm1533 = vmor %vm1531, %vm1532
  %v1534 = vsel %vm1533, %v1525, %v1530
  %v1535 = vrsqrt.pop %v1095
  %v1536 = vmul.f32 %v1535, %v1095
  %v1537 = vmul.f32 %v1536, %v1535
  %v1538 = vmul.f32 0.5, %v1537
  %v1539 = vsub.f32 1.5, %v1538
  %v1540 = vmul.f32 %v1535, %v1539
  %vm1541 = vweird.f32 %v1095
  %vm1542 = vweird.f32 %v1535
  %vm1543 = vmor %vm1541, %vm1542
  %v1544 = vsel %vm1543, %v1535, %v1540
  %v1545 = vrsqrt.pop %v1096
  %v1546 = vmul.f32 %v1545, %v1096
  %v1547 = vmul.f32 %v1546, %v1545
  %v1548 = vmul.f32 0.5, %v1547
  %v1549 = vsub.f32 1.5, %v1548
  %v1550 = vmul.f32 %v1545, %v1549
  %vm1551 = vweird.f32 %v1096
  %vm1552 = vweird.f32 %v1545
  %vm1553 = vmor %vm1551, %vm1552
  %v1554 = vsel %vm1553, %v1545, %v1550
  %v1555 = vrsqrt.pop %v1097
  %v1556 = vmul.f32 %v1555, %v1097
  %v1557 = vmul.f32 %v1556, %v1555
  %v1558 = vmul.f32 0.5, %v1557
  %v1559 = vsub.f32 1.5, %v1558
  %v1560 = vmul.f32 %v1555, %v1559
  %vm1561 = vweird.f32 %v1097
  %vm1562 = vweird.f32 %v1555
  %vm1563 = vmor %vm1561, %vm1562
  %v1564 = vsel %vm1563, %v1555, %v1560
  %v1565 = vrsqrt.pop %v1098
  %v1566 = vmul.f32 %v1565, %v1098
  %v1567 = vmul.f32 %v1566, %v1565
  %v1568 = vmul.f32 0.5, %v1567
  %v1569 = vsub.f32 1.5, %v1568
  %v1570 = vmul.f32 %v1565, %v1569
  %vm1571 = vweird.f32 %v1098
  %vm1572 = vweird.f32 %v1565
  %vm1573 = vmor %vm1571, %vm1572
  %v1574 = vsel %vm1573, %v1565, %v1570
  %v1575 = vrsqrt.pop %v1099
  %v1576 = vmul.f32 %v1575, %v1099
  %v1577 = vmul.f32 %v1576, %v1575
  %v1578 = vmul.f32 0.5, %v1577
  %v1579 = vsub.f32 1.5, %v1578
  %v1580 = vmul.f32 %v1575, %v1579
  %vm1581 = vweird.f32 %v1099
  %vm1582 = vweird.f32 %v1575
  %vm1583 = vmor %vm1581, %vm1582
  %v1584 = vsel %vm1583, %v1575, %v1580
  %v1585 = vrsqrt.pop %v1100
  %v1586 = vmul.f32 %v1585, %v1100
  %v1587 = vmul.f32 %v1586, %v1585
  %v1588 = vmul.f32 0.5, %v1587
  %v1589 = vsub.f32 1.5, %v1588
  %v1590 = vmul.f32 %v1585, %v1589
  %vm1591 = vweird.f32 %v1100
  %vm1592 = vweird.f32 %v1585
  %vm1593 = vmor %vm1591, %vm1592
  %v1594 = vsel %vm1593, %v1585, %v1590
  %v1595 = vrsqrt.pop %v1101
  %v1596 = vmul.f32 %v1595, %v1101
  %v1597 = vmul.f32 %v1596, %v1595
  %v1598 = vmul.f32 0.5, %v1597
  %v1599 = vsub.f32 1.5, %v1598
  %v1600 = vmul.f32 %v1595, %v1599
  %vm1601 = vweird.f32 %v1101
  %vm1602 = vweird.f32 %v1595
  %vm1603 = vmor %vm1601, %vm1602
  %v1604 = vsel %vm1603, %v1595, %v1600
  %v1605 = vrsqrt.pop %v1102
  %v1606 = vmul.f32 %v1605, %v1102
  %v1607 = vmul.f32 %v1606, %v1605
  %v1608 = vmul.f32 0.5, %v1607
  %v1609 = vsub.f32 1.5, %v1608
  %v1610 = vmul.f32 %v1605, %v1609
  %vm1611 = vweird.f32 %v1102
  %vm1612 = vweird.f32 %v1605
  %vm1613 = vmor %vm1611, %vm1612
  %v1614 = vsel %vm1613, %v1605, %v1610
  %v1615 = vrsqrt.pop %v1103
  %v1616 = vmul.f32 %v1615, %v1103
  %v1617 = vmul.f32 %v1616, %v1615
  %v1618 = vmul.f32 0.5, %v1617
  %v1619 = vsub.f32 1.5, %v1618
  %v1620 = vmul.f32 %v1615, %v1619
  %vm1621 = vweird.f32 %v1103
  %vm1622 = vweird.f32 %v1615
  %vm1623 = vmor %vm1621, %vm1622
  %v1624 = vsel %vm1623, %v1615, %v1620
  %v1625 = vrsqrt.pop %v1104
  %v1626 = vmul.f32 %v1625, %v1104
  %v1627 = vmul.f32 %v1626, %v1625
  %v1628 = vmul.f32 0.5, %v1627
  %v1629 = vsub.f32 1.5, %v1628
  %v1630 = vmul.f32 %v1625, %v1629
  %vm1631 = vweird.f32 %v1104
  %vm1632 = vweird.f32 %v1625
  %vm1633 = vmor %vm1631, %vm1632
  %v1634 = vsel %vm1633, %v1625, %v1630
  %v1635 = vrsqrt.pop %v1105
  %v1636 = vmul.f32 %v1635, %v1105
  %v1637 = vmul.f32 %v1636, %v1635
  %v1638 = vmul.f32 0.5, %v1637
  %v1639 = vsub.f32 1.5, %v1638
  %v1640 = vmul.f32 %v1635, %v1639
  %vm1641 = vweird.f32 %v1105
  %vm1642 = vweird.f32 %v1635
  %vm1643 = vmor %vm1641, %vm1642
  %v1644 = vsel %vm1643, %v1635, %v1640
  %v1645 = vrsqrt.pop %v1106
  %v1646 = vmul.f32 %v1645, %v1106
  %v1647 = vmul.f32 %v1646, %v1645
  %v1648 = vmul.f32 0.5, %v1647
  %v1649 = vsub.f32 1.5, %v1648
  %v1650 = vmul.f32 %v1645, %v1649
  %vm1651 = vweird.f32 %v1106
  %vm1652 = vweird.f32 %v1645
  %vm1653 = vmor %vm1651, %vm1652
  %v1654 = vsel %vm1653, %v1645, %v1650
  %v1655 = vrsqrt.pop %v1107
  %v1656 = vmul.f32 %v1655, %v1107
  %v1657 = vmul.f32 %v1656, %v1655
  %v1658 = vmul.f32 0.5, %v1657
  %v1659 = vsub.f32 1.5, %v1658
  %v1660 = vmul.f32 %v1655, %v1659
  %vm1661 = vweird.f32 %v1107
  %vm1662 = vweird.f32 %v1655
  %vm1663 = vmor %vm1661, %vm1662
  %v1664 = vsel %vm1663, %v1655, %v1660
  %v1665 = vrsqrt.pop %v1108
  %v1666 = vmul.f32 %v1665, %v1108
  %v1667 = vmul.f32 %v1666, %v1665
  %v1668 = vmul.f32 0.5, %v1667
  %v1669 = vsub.f32 1.5, %v1668
  %v1670 = vmul.f32 %v1665, %v1669
  %vm1671 = vweird.f32 %v1108
  %vm1672 = vweird.f32 %v1665
  %vm1673 = vmor %vm1671, %vm1672
  %v1674 = vsel %vm1673, %v1665, %v1670
  %v1675 = vrsqrt.pop %v1109
  %v1676 = vmul.f32 %v1675, %v1109
  %v1677 = vmul.f32 %v1676, %v1675
  %v1678 = vmul.f32 0.5, %v1677
  %v1679 = vsub.f32 1.5, %v1678
  %v1680 = vmul.f32 %v1675, %v1679
  %vm1681 = vweird.f32 %v1109
  %vm1682 = vweird.f32 %v1675
  %vm1683 = vmor %vm1681, %vm1682
  %v1684 = vsel %vm1683, %v1675, %v1680
  %v1685 = vrsqrt.pop %v1110
  %v1686 = vmul.f32 %v1685, %v1110
  %v1687 = vmul.f32 %v1686, %v1685
  %v1688 = vmul.f32 0.5, %v1687
  %v1689 = vsub.f32 1.5, %v1688
  %v1690 = vmul.f32 %v1685, %v1689
  %vm1691 = vweird.f32 %v1110
  %vm1692 = vweird.f32 %v1685
  %vm1693 = vmor %vm1691, %vm1692
  %v1694 = vsel %vm1693, %v1685, %v1690
  %v1695 = vrsqrt.pop %v1111
  %v1696 = vmul.f32 %v1695, %v1111
  %v1697 = vmul.f32 %v1696, %v1695
  %v1698 = vmul.f32 0.5, %v1697
  %v1699 = vsub.f32 1.5, %v1698
  %v1700 = vmul.f32 %v1695, %v1699
  %vm1701 = vweird.f32 %v1111
  %vm1702 = vweird.f32 %v1695
  %vm1703 = vmor %vm1701, %vm1702
  %v1704 = vsel %vm1703, %v1695, %v1700
  %v1705 = vrsqrt.pop %v1112
  %v1706 = vmul.f32 %v1705, %v1112
  %v1707 = vmul.f32 %v1706, %v1705
  %v1708 = vmul.f32 0.5, %v1707
  %v1709 = vsub.f32 1.5, %v1708
  %v1710 = vmul.f32 %v1705, %v1709
  %vm1711 = vweird.f32 %v1112
  %vm1712 = vweird.f32 %v1705
  %vm1713 = vmor %vm1711, %vm1712
  %v1714 = vsel %vm1713, %v1705, %v1710
  %v1715 = vrsqrt.pop %v1113
  %v1716 = vmul.f32 %v1715, %v1113
  %v1717 = vmul.f32 %v1716, %v1715
  %v1718 = vmul.f32 0.5, %v1717
  %v1719 = vsub.f32 1.5, %v1718
  %v1720 = vmul.f32 %v1715, %v1719
  %vm1721 = vweird.f32 %v1113
  %vm1722 = vweird.f32 %v1715
  %vm1723 = vmor %vm1721, %vm1722
  %v1724 = vsel %vm1723, %v1715, %v1720
  %v1725 = vrsqrt.pop %v1114
  %v1726 = vmul.f32 %v1725, %v1114
  %v1727 = vmul.f32 %v1726, %v1725
  %v1728 = vmul.f32 0.5, %v1727
  %v1729 = vsub.f32 1.5, %v1728
  %v1730 = vmul.f32 %v1725, %v1729
  %vm1731 = vweird.f32 %v1114
  %vm1732 = vweird.f32 %v1725
  %vm1733 = vmor %vm1731, %vm1732
  %v1734 = vsel %vm1733, %v1725, %v1730
  %v1735 = vrsqrt.pop %v1115
  %v1736 = vmul.f32 %v1735, %v1115
  %v1737 = vmul.f32 %v1736, %v1735
  %v1738 = vmul.f32 0.5, %v1737
  %v1739 = vsub.f32 1.5, %v1738
  %v1740 = vmul.f32 %v1735, %v1739
  %vm1741 = vweird.f32 %v1115
  %vm1742 = vweird.f32 %v1735
  %vm1743 = vmor %vm1741, %vm1742
  %v1744 = vsel %vm1743, %v1735, %v1740
  %v1745 = vrsqrt.pop %v1116
  %v1746 = vmul.f32 %v1745, %v1116
  %v1747 = vmul.f32 %v1746, %v1745
  %v1748 = vmul.f32 0.5, %v1747
  %v1749 = vsub.f32 1.5, %v1748
  %v1750 = vmul.f32 %v1745, %v1749
  %vm1751 = vweird.f32 %v1116
  %vm1752 = vweird.f32 %v1745
  %vm1753 = vmor %vm1751, %vm1752
  %v1754 = vsel %vm1753, %v1745, %v1750
  %v1755 = vrsqrt.pop %v1117
  %v1756 = vmul.f32 %v1755, %v1117
  %v1757 = vmul.f32 %v1756, %v1755
  %v1758 = vmul.f32 0.5, %v1757
  %v1759 = vsub.f32 1.5, %v1758
  %v1760 = vmul.f32 %v1755, %v1759
  %vm1761 = vweird.f32 %v1117
  %vm1762 = vweird.f32 %v1755
  %vm1763 = vmor %vm1761, %vm1762
  %v1764 = vsel %vm1763, %v1755, %v1760
  %v1765 = vrsqrt.pop %v1118
  %v1766 = vmul.f32 %v1765, %v1118
  %v1767 = vmul.f32 %v1766, %v1765
  %v1768 = vmul.f32 0.5, %v1767
  %v1769 = vsub.f32 1.5, %v1768
  %v1770 = vmul.f32 %v1765, %v1769
  %vm1771 = vweird.f32 %v1118
  %vm1772 = vweird.f32 %v1765
  %vm1773 = vmor %vm1771, %vm1772
  %v1774 = vsel %vm1773, %v1765, %v1770
  %v1775 = vrsqrt.pop %v1119
  %v1776 = vmul.f32 %v1775, %v1119
  %v1777 = vmul.f32 %v1776, %v1775
  %v1778 = vmul.f32 0.5, %v1777
  %v1779 = vsub.f32 1.5, %v1778
  %v1780 = vmul.f32 %v1775, %v1779
  %vm1781 = vweird.f32 %v1119
  %vm1782 = vweird.f32 %v1775
  %vm1783 = vmor %vm1781, %vm1782
  %v1784 = vsel %vm1783, %v1775, %v1780
  %v1785 = vrsqrt.pop %v1120
  %v1786 = vmul.f32 %v1785, %v1120
  %v1787 = vmul.f32 %v1786, %v1785
  %v1788 = vmul.f32 0.5, %v1787
  %v1789 = vsub.f32 1.5, %v1788
  %v1790 = vmul.f32 %v1785, %v1789
  %vm1791 = vweird.f32 %v1120
  %vm1792 = vweird.f32 %v1785
  %vm1793 = vmor %vm1791, %vm1792
  %v1794 = vsel %vm1793, %v1785, %v1790
  %v1795 = vrsqrt.pop %v1121
  %v1796 = vmul.f32 %v1795, %v1121
  %v1797 = vmul.f32 %v1796, %v1795
  %v1798 = vmul.f32 0.5, %v1797
  %v1799 = vsub.f32 1.5, %v1798
  %v1800 = vmul.f32 %v1795, %v1799
  %vm1801 = vweird.f32 %v1121
  %vm1802 = vweird.f32 %v1795
  %vm1803 = vmor %vm1801, %vm1802
  %v1804 = vsel %vm1803, %v1795, %v1800
  %v1805 = vrsqrt.pop %v1122
  %v1806 = vmul.f32 %v1805, %v1122
  %v1807 = vmul.f32 %v1806, %v1805
  %v1808 = vmul.f32 0.5, %v1807
  %v1809 = vsub.f32 1.5, %v1808
  %v1810 = vmul.f32 %v1805, %v1809
  %vm1811 = vweird.f32 %v1122
  %vm1812 = vweird.f32 %v1805
  %vm1813 = vmor %vm1811, %vm1812
  %v1814 = vsel %vm1813, %v1805, %v1810
  %v1815 = vrsqrt.pop %v1123
  %v1816 = vmul.f32 %v1815, %v1123
  %v1817 = vmul.f32 %v1816, %v1815
  %v1818 = vmul.f32 0.5, %v1817
  %v1819 = vsub.f32 1.5, %v1818
  %v1820 = vmul.f32 %v1815, %v1819
  %vm1821 = vweird.f32 %v1123
  %vm1822 = vweird.f32 %v1815
  %vm1823 = vmor %vm1821, %vm1822
  %v1824 = vsel %vm1823, %v1815, %v1820
  %v1825 = vrsqrt.pop %v1124
  %v1826 = vmul.f32 %v1825, %v1124
  %v1827 = vmul.f32 %v1826, %v1825
  %v1828 = vmul.f32 0.5, %v1827
  %v1829 = vsub.f32 1.5, %v1828
  %v1830 = vmul.f32 %v1825, %v1829
  %vm1831 = vweird.f32 %v1124
  %vm1832 = vweird.f32 %v1825
  %vm1833 = vmor %vm1831, %vm1832
  %v1834 = vsel %vm1833, %v1825, %v1830
  %v1835 = vrsqrt.pop %v1125
  %v1836 = vmul.f32 %v1835, %v1125
  %v1837 = vmul.f32 %v1836, %v1835
  %v1838 = vmul.f32 0.5, %v1837
  %v1839 = vsub.f32 1.5, %v1838
  %v1840 = vmul.f32 %v1835, %v1839
  %vm1841 = vweird.f32 %v1125
  %vm1842 = vweird.f32 %v1835
  %vm1843 = vmor %vm1841, %vm1842
  %v1844 = vsel %vm1843, %v1835, %v1840
  %v1845 = vrsqrt.pop %v1126
  %v1846 = vmul.f32 %v1845, %v1126
  %v1847 = vmul.f32 %v1846, %v1845
  %v1848 = vmul.f32 0.5, %v1847
  %v1849 = vsub.f32 1.5, %v1848
  %v1850 = vmul.f32 %v1845, %v1849
  %vm1851 = vweird.f32 %v1126
  %vm1852 = vweird.f32 %v1845
  %vm1853 = vmor %vm1851, %vm1852
  %v1854 = vsel %vm1853, %v1845, %v1850
  %v1855 = vrsqrt.pop %v1127
  %v1856 = vmul.f32 %v1855, %v1127
  %v1857 = vmul.f32 %v1856, %v1855
  %v1858 = vmul.f32 0.5, %v1857
  %v1859 = vsub.f32 1.5, %v1858
  %v1860 = vmul.f32 %v1855, %v1859
  %vm1861 = vweird.f32 %v1127
  %vm1862 = vweird.f32 %v1855
  %vm1863 = vmor %vm1861, %vm1862
  %v1864 = vsel %vm1863, %v1855, %v1860
  %v1865 = vrsqrt.pop %v1128
  %v1866 = vmul.f32 %v1865, %v1128
  %v1867 = vmul.f32 %v1866, %v1865
  %v1868 = vmul.f32 0.5, %v1867
  %v1869 = vsub.f32 1.5, %v1868
  %v1870 = vmul.f32 %v1865, %v1869
  %vm1871 = vweird.f32 %v1128
  %vm1872 = vweird.f32 %v1865
  %vm1873 = vmor %vm1871, %vm1872
  %v1874 = vsel %vm1873, %v1865, %v1870
  %v1875 = vrsqrt.pop %v1129
  %v1876 = vmul.f32 %v1875, %v1129
  %v1877 = vmul.f32 %v1876, %v1875
  %v1878 = vmul.f32 0.5, %v1877
  %v1879 = vsub.f32 1.5, %v1878
  %v1880 = vmul.f32 %v1875, %v1879
  %vm1881 = vweird.f32 %v1129
  %vm1882 = vweird.f32 %v1875
  %vm1883 = vmor %vm1881, %vm1882
  %v1884 = vsel %vm1883, %v1875, %v1880
  %v1885 = vrsqrt.pop %v1130
  %v1886 = vmul.f32 %v1885, %v1130
  %v1887 = vmul.f32 %v1886, %v1885
  %v1888 = vmul.f32 0.5, %v1887
  %v1889 = vsub.f32 1.5, %v1888
  %v1890 = vmul.f32 %v1885, %v1889
  %vm1891 = vweird.f32 %v1130
  %vm1892 = vweird.f32 %v1885
  %vm1893 = vmor %vm1891, %vm1892
  %v1894 = vsel %vm1893, %v1885, %v1890
  %v1895 = vrsqrt.pop %v1131
  %v1896 = vmul.f32 %v1895, %v1131
  %v1897 = vmul.f32 %v1896, %v1895
  %v1898 = vmul.f32 0.5, %v1897
  %v1899 = vsub.f32 1.5, %v1898
  %v1900 = vmul.f32 %v1895, %v1899
  %vm1901 = vweird.f32 %v1131
  %vm1902 = vweird.f32 %v1895
  %vm1903 = vmor %vm1901, %vm1902
  %v1904 = vsel %vm1903, %v1895, %v1900
  %v1905 = vrsqrt.pop %v1132
  %v1906 = vmul.f32 %v1905, %v1132
  %v1907 = vmul.f32 %v1906, %v1905
  %v1908 = vmul.f32 0.5, %v1907
  %v1909 = vsub.f32 1.5, %v1908
  %v1910 = vmul.f32 %v1905, %v1909
  %vm1911 = vweird.f32 %v1132
  %vm1912 = vweird.f32 %v1905
  %vm1913 = vmor %vm1911, %vm1912
  %v1914 = vsel %vm1913, %v1905, %v1910
  %v1915 = vrsqrt.pop %v1133
  %v1916 = vmul.f32 %v1915, %v1133
  %v1917 = vmul.f32 %v1916, %v1915
  %v1918 = vmul.f32 0.5, %v1917
  %v1919 = vsub.f32 1.5, %v1918
  %v1920 = vmul.f32 %v1915, %v1919
  %vm1921 = vweird.f32 %v1133
  %vm1922 = vweird.f32 %v1915
  %vm1923 = vmor %vm1921, %vm1922
  %v1924 = vsel %vm1923, %v1915, %v1920
  %v1925 = vrsqrt.pop %v1134
  %v1926 = vmul.f32 %v1925, %v1134
  %v1927 = vmul.f32 %v1926, %v1925
  %v1928 = vmul.f32 0.5, %v1927
  %v1929 = vsub.f32 1.5, %v1928
  %v1930 = vmul.f32 %v1925, %v1929
  %vm1931 = vweird.f32 %v1134
  %vm1932 = vweird.f32 %v1925
  %vm1933 = vmor %vm1931, %vm1932
  %v1934 = vsel %vm1933, %v1925, %v1930
  %v1935 = vmul.f32 %v895, %v1144
  %v1936 = vmul.f32 %v896, %v1154
  %v1937 = vmul.f32 %v897, %v1164
  %v1938 = vmul.f32 %v898, %v1174
  %v1939 = vmul.f32 %v899, %v1184
  %v1940 = vmul.f32 %v900, %v1194
  %v1941 = vmul.f32 %v901, %v1204
  %v1942 = vmul.f32 %v902, %v1214
  %v1943 = vmul.f32 %v903, %v1224
  %v1944 = vmul.f32 %v904, %v1234
  %v1945 = vmul.f32 %v905, %v1244
  %v1946 = vmul.f32 %v906, %v1254
  %v1947 = vmul.f32 %v907, %v1264
  %v1948 = vmul.f32 %v908, %v1274
  %v1949 = vmul.f32 %v909, %v1284
  %v1950 = vmul.f32 %v910, %v1294
  %v1951 = vmul.f32 %v911, %v1304
  %v1952 = vmul.f32 %v912, %v1314
  %v1953 = vmul.f32 %v913, %v1324
  %v1954 = vmul.f32 %v914, %v1334
  %v1955 = vmul.f32 %v915, %v1344
  %v1956 = vmul.f32 %v916, %v1354
  %v1957 = vmul.f32 %v917, %v1364
  %v1958 = vmul.f32 %v918, %v1374
  %v1959 = vmul.f32 %v919, %v1384
  %v1960 = vmul.f32 %v920, %v1394
  %v1961 = vmul.f32 %v921, %v1404
  %v1962 = vmul.f32 %v922, %v1414
  %v1963 = vmul.f32 %v923, %v1424
  %v1964 = vmul.f32 %v924, %v1434
  %v1965 = vmul.f32 %v925, %v1444
  %v1966 = vmul.f32 %v926, %v1454
  %v1967 = vmul.f32 %v927, %v1464
  %v1968 = vmul.f32 %v928, %v1474
  %v1969 = vmul.f32 %v929, %v1484
  %v1970 = vmul.f32 %v930, %v1494
  %v1971 = vmul.f32 %v931, %v1504
  %v1972 = vmul.f32 %v932, %v1514
  %v1973 = vmul.f32 %v933, %v1524
  %v1974 = vmul.f32 %v934, %v1534
  %v1975 = vmul.f32 %v935, %v1544
  %v1976 = vmul.f32 %v936, %v1554
  %v1977 = vmul.f32 %v937, %v1564
  %v1978 = vmul.f32 %v938, %v1574
  %v1979 = vmul.f32 %v939, %v1584
  %v1980 = vmul.f32 %v940, %v1594
  %v1981 = vmul.f32 %v941, %v1604
  %v1982 = vmul.f32 %v942, %v1614
  %v1983 = vmul.f32 %v943, %v1624
  %v1984 = vmul.f32 %v944, %v1634
  %v1985 = vmul.f32 %v945, %v1644
  %v1986 = vmul.f32 %v946, %v1654
  %v1987 = vmul.f32 %v947, %v1664
  %v1988 = vmul.f32 %v948, %v1674
  %v1989 = vmul.f32 %v949, %v1684
  %v1990 = vmul.f32 %v950, %v1694
  %v1991 = vmul.f32 %v951, %v1704
  %v1992 = vmul.f32 %v952, %v1714
  %v1993 = vmul.f32 %v953, %v1724
  %v1994 = vmul.f32 %v954, %v1734
  %v1995 = vmul.f32 %v955, %v1744
  %v1996 = vmul.f32 %v956, %v1754
  %v1997 = vmul.f32 %v957, %v1764
  %v1998 = vmul.f32 %v958, %v1774
  %v1999 = vmul.f32 %v959, %v1784
  %v2000 = vmul.f32 %v960, %v1794
  %v2001 = vmul.f32 %v961, %v1804
  %v2002 = vmul.f32 %v962, %v1814
  %v2003 = vmul.f32 %v963, %v1824
  %v2004 = vmul.f32 %v964, %v1834
  %v2005 = vmul.f32 %v965, %v1844
  %v2006 = vmul.f32 %v966, %v1854
  %v2007 = vmul.f32 %v967, %v1864
  %v2008 = vmul.f32 %v968, %v1874
  %v2009 = vmul.f32 %v969, %v1884
  %v2010 = vmul.f32 %v970, %v1894
  %v2011 = vmul.f32 %v971, %v1904
  %v2012 = vmul.f32 %v972, %v1914
  %v2013 = vmul.f32 %v973, %v1924
  %v2014 = vmul.f32 %v974, %v1934
  %v2015 = vmul.f32 %v335, %v1935
  %v2016 = vmul.f32 %v336, %v1936
  %v2017 = vmul.f32 %v337, %v1937
  %v2018 = vmul.f32 %v338, %v1938
  %v2019 = vmul.f32 %v339, %v1939
  %v2020 = vmul.f32 %v340, %v1940
  %v2021 = vmul.f32 %v341, %v1941
  %v2022 = vmul.f32 %v342, %v1942
  %v2023 = vmul.f32 %v343, %v1943
  %v2024 = vmul.f32 %v344, %v1944
  %v2025 = vmul.f32 %v345, %v1945
  %v2026 = vmul.f32 %v346, %v1946
  %v2027 = vmul.f32 %v347, %v1947
  %v2028 = vmul.f32 %v348, %v1948
  %v2029 = vmul.f32 %v349, %v1949
  %v2030 = vmul.f32 %v350, %v1950
  %v2031 = vmul.f32 %v351, %v1951
  %v2032 = vmul.f32 %v352, %v1952
  %v2033 = vmul.f32 %v353, %v1953
  %v2034 = vmul.f32 %v354, %v1954
  %v2035 = vmul.f32 %v355, %v1955
  %v2036 = vmul.f32 %v356, %v1956
  %v2037 = vmul.f32 %v357, %v1957
  %v2038 = vmul.f32 %v358, %v1958
  %v2039 = vmul.f32 %v359, %v1959
  %v2040 = vmul.f32 %v360, %v1960
  %v2041 = vmul.f32 %v361, %v1961
  %v2042 = vmul.f32 %v362, %v1962
  %v2043 = vmul.f32 %v363, %v1963
  %v2044 = vmul.f32 %v364, %v1964
  %v2045 = vmul.f32 %v365, %v1965
  %v2046 = vmul.f32 %v366, %v1966
  %v2047 = vmul.f32 %v367, %v1967
  %v2048 = vmul.f32 %v368, %v1968
  %v2049 = vmul.f32 %v369, %v1969
  %v2050 = vmul.f32 %v370, %v1970
  %v2051 = vmul.f32 %v371, %v1971
  %v2052 = vmul.f32 %v372, %v1972
  %v2053 = vmul.f32 %v373, %v1973
  %v2054 = vmul.f32 %v374, %v1974
  %v2055 = vmul.f32 %v375, %v1975
  %v2056 = vmul.f32 %v376, %v1976
  %v2057 = vmul.f32 %v377, %v1977
  %v2058 = vmul.f32 %v378, %v1978
  %v2059 = vmul.f32 %v379, %v1979
  %v2060 = vmul.f32 %v380, %v1980
  %v2061 = vmul.f32 %v381, %v1981
  %v2062 = vmul.f32 %v382, %v1982
  %v2063 = vmul.f32 %v383, %v1983
  %v2064 = vmul.f32 %v384, %v1984
  %v2065 = vmul.f32 %v385, %v1985
  %v2066 = vmul.f32 %v386, %v1986
  %v2067 = vmul.f32 %v387, %v1987
  %v2068 = vmul.f32 %v388, %v1988
  %v2069 = vmul.f32 %v389, %v1989
  %v2070 = vmul.f32 %v390, %v1990
  %v2071 = vmul.f32 %v391, %v1991
  %v2072 = vmul.f32 %v392, %v1992
  %v2073 = vmul.f32 %v393, %v1993
  %v2074 = vmul.f32 %v394, %v1994
  %v2075 = vmul.f32 %v395, %v1995
  %v2076 = vmul.f32 %v396, %v1996
  %v2077 = vmul.f32 %v397, %v1997
  %v2078 = vmul.f32 %v398, %v1998
  %v2079 = vmul.f32 %v399, %v1999
  %v2080 = vmul.f32 %v400, %v2000
  %v2081 = vmul.f32 %v401, %v2001
  %v2082 = vmul.f32 %v402, %v2002
  %v2083 = vmul.f32 %v403, %v2003
  %v2084 = vmul.f32 %v404, %v2004
  %v2085 = vmul.f32 %v405, %v2005
  %v2086 = vmul.f32 %v406, %v2006
  %v2087 = vmul.f32 %v407, %v2007
  %v2088 = vmul.f32 %v408, %v2008
  %v2089 = vmul.f32 %v409, %v2009
  %v2090 = vmul.f32 %v410, %v2010
  %v2091 = vmul.f32 %v411, %v2011
  %v2092 = vmul.f32 %v412, %v2012
  %v2093 = vmul.f32 %v413, %v2013
  %v2094 = vmul.f32 %v414, %v2014
  %v2095 = vsub.f32 %v975, %v2015
  %v2096 = vsub.f32 %v976, %v2016
  %v2097 = vsub.f32 %v977, %v2017
  %v2098 = vsub.f32 %v978, %v2018
  %v2099 = vsub.f32 %v979, %v2019
  %v2100 = vsub.f32 %v980, %v2020
  %v2101 = vsub.f32 %v981, %v2021
  %v2102 = vsub.f32 %v982, %v2022
  %v2103 = vsub.f32 %v983, %v2023
  %v2104 = vsub.f32 %v984, %v2024
  %v2105 = vsub.f32 %v985, %v2025
  %v2106 = vsub.f32 %v986, %v2026
  %v2107 = vsub.f32 %v987, %v2027
  %v2108 = vsub.f32 %v988, %v2028
  %v2109 = vsub.f32 %v989, %v2029
  %v2110 = vsub.f32 %v990, %v2030
  %v2111 = vsub.f32 %v991, %v2031
  %v2112 = vsub.f32 %v992, %v2032
  %v2113 = vsub.f32 %v993, %v2033
  %v2114 = vsub.f32 %v994, %v2034
  %v2115 = vsub.f32 %v995, %v2035
  %v2116 = vsub.f32 %v996, %v2036
  %v2117 = vsub.f32 %v997, %v2037
  %v2118 = vsub.f32 %v998, %v2038
  %v2119 = vsub.f32 %v999, %v2039
  %v2120 = vsub.f32 %v1000, %v2040
  %v2121 = vsub.f32 %v1001, %v2041
  %v2122 = vsub.f32 %v1002, %v2042
  %v2123 = vsub.f32 %v1003, %v2043
  %v2124 = vsub.f32 %v1004, %v2044
  %v2125 = vsub.f32 %v1005, %v2045
  %v2126 = vsub.f32 %v1006, %v2046
  %v2127 = vsub.f32 %v1007, %v2047
  %v2128 = vsub.f32 %v1008, %v2048
  %v2129 = vsub.f32 %v1009, %v2049
  %v2130 = vsub.f32 %v1010, %v2050
  %v2131 = vsub.f32 %v1011, %v2051
  %v2132 = vsub.f32 %v1012, %v2052
  %v2133 = vsub.f32 %v1013, %v2053
  %v2134 = vsub.f32 %v1014, %v2054
  %v2135 = vsub.f32 %v1015, %v2055
  %v2136 = vsub.f32 %v1016, %v2056
  %v2137 = vsub.f32 %v1017, %v2057
  %v2138 = vsub.f32 %v1018, %v2058
  %v2139 = vsub.f32 %v1019, %v2059
  %v2140 = vsub.f32 %v1020, %v2060
  %v2141 = vsub.f32 %v1021, %v2061
  %v2142 = vsub.f32 %v1022, %v2062
  %v2143 = vsub.f32 %v1023, %v2063
  %v2144 = vsub.f32 %v1024, %v2064
  %v2145 = vsub.f32 %v1025, %v2065
  %v2146 = vsub.f32 %v1026, %v2066
  %v2147 = vsub.f32 %v1027, %v2067
  %v2148 = vsub.f32 %v1028, %v2068
  %v2149 = vsub.f32 %v1029, %v2069
  %v2150 = vsub.f32 %v1030, %v2070
  %v2151 = vsub.f32 %v1031, %v2071
  %v2152 = vsub.f32 %v1032, %v2072
  %v2153 = vsub.f32 %v1033, %v2073
  %v2154 = vsub.f32 %v1034, %v2074
  %v2155 = vsub.f32 %v1035, %v2075
  %v2156 = vsub.f32 %v1036, %v2076
  %v2157 = vsub.f32 %v1037, %v2077
  %v2158 = vsub.f32 %v1038, %v2078
  %v2159 = vsub.f32 %v1039, %v2079
  %v2160 = vsub.f32 %v1040, %v2080
  %v2161 = vsub.f32 %v1041, %v2081
  %v2162 = vsub.f32 %v1042, %v2082
  %v2163 = vsub.f32 %v1043, %v2083
  %v2164 = vsub.f32 %v1044, %v2084
  %v2165 = vsub.f32 %v1045, %v2085
  %v2166 = vsub.f32 %v1046, %v2086
  %v2167 = vsub.f32 %v1047, %v2087
  %v2168 = vsub.f32 %v1048, %v2088
  %v2169 = vsub.f32 %v1049, %v2089
  %v2170 = vsub.f32 %v1050, %v2090
  %v2171 = vsub.f32 %v1051, %v2091
  %v2172 = vsub.f32 %v1052, %v2092
  %v2173 = vsub.f32 %v1053, %v2093
  %v2174 = vsub.f32 %v1054, %v2094
  %2176 = vset.pattern.permute.xlu0 0
  %2177 = vperm.xlu0 %2176, %v1935
  %v2178 = vpop.permute.xlu0 %2177
  %2181 = vset.pattern.permute.xlu0 0
  %2182 = vperm.xlu0 %2181, %v1936
  %v2183 = vpop.permute.xlu0 %2182
  %2186 = vset.pattern.permute.xlu0 0
  %2187 = vperm.xlu0 %2186, %v1937
  %v2188 = vpop.permute.xlu0 %2187
  %2191 = vset.pattern.permute.xlu0 0
  %2192 = vperm.xlu0 %2191, %v1938
  %v2193 = vpop.permute.xlu0 %2192
  %2196 = vset.pattern.permute.xlu0 0
  %2197 = vperm.xlu0 %2196, %v1939
  %v2198 = vpop.permute.xlu0 %2197
  %2201 = vset.pattern.permute.xlu0 0
  %2202 = vperm.xlu0 %2201, %v1940
  %v2203 = vpop.permute.xlu0 %2202
  %2206 = vset.pattern.permute.xlu0 0
  %2207 = vperm.xlu0 %2206, %v1941
  %v2208 = vpop.permute.xlu0 %2207
  %2211 = vset.pattern.permute.xlu0 0
  %2212 = vperm.xlu0 %2211, %v1942
  %v2213 = vpop.permute.xlu0 %2212
  %2216 = vset.pattern.permute.xlu0 0
  %2217 = vperm.xlu0 %2216, %v1943
  %v2218 = vpop.permute.xlu0 %2217
  %2221 = vset.pattern.permute.xlu0 0
  %2222 = vperm.xlu0 %2221, %v1944
  %v2223 = vpop.permute.xlu0 %2222
  %2226 = vset.pattern.permute.xlu0 0
  %2227 = vperm.xlu0 %2226, %v1945
  %v2228 = vpop.permute.xlu0 %2227
  %2231 = vset.pattern.permute.xlu0 0
  %2232 = vperm.xlu0 %2231, %v1946
  %v2233 = vpop.permute.xlu0 %2232
  %2236 = vset.pattern.permute.xlu0 0
  %2237 = vperm.xlu0 %2236, %v1947
  %v2238 = vpop.permute.xlu0 %2237
  %2241 = vset.pattern.permute.xlu0 0
  %2242 = vperm.xlu0 %2241, %v1948
  %v2243 = vpop.permute.xlu0 %2242
  %2246 = vset.pattern.permute.xlu0 0
  %2247 = vperm.xlu0 %2246, %v1949
  %v2248 = vpop.permute.xlu0 %2247
  %2251 = vset.pattern.permute.xlu0 0
  %2252 = vperm.xlu0 %2251, %v1950
  %v2253 = vpop.permute.xlu0 %2252
  %2256 = vset.pattern.permute.xlu0 0
  %2257 = vperm.xlu0 %2256, %v1951
  %v2258 = vpop.permute.xlu0 %2257
  %2261 = vset.pattern.permute.xlu0 0
  %2262 = vperm.xlu0 %2261, %v1952
  %v2263 = vpop.permute.xlu0 %2262
  %2266 = vset.pattern.permute.xlu0 0
  %2267 = vperm.xlu0 %2266, %v1953
  %v2268 = vpop.permute.xlu0 %2267
  %2271 = vset.pattern.permute.xlu0 0
  %2272 = vperm.xlu0 %2271, %v1954
  %v2273 = vpop.permute.xlu0 %2272
  %2276 = vset.pattern.permute.xlu0 0
  %2277 = vperm.xlu0 %2276, %v1955
  %v2278 = vpop.permute.xlu0 %2277
  %2281 = vset.pattern.permute.xlu0 0
  %2282 = vperm.xlu0 %2281, %v1956
  %v2283 = vpop.permute.xlu0 %2282
  %2286 = vset.pattern.permute.xlu0 0
  %2287 = vperm.xlu0 %2286, %v1957
  %v2288 = vpop.permute.xlu0 %2287
  %2291 = vset.pattern.permute.xlu0 0
  %2292 = vperm.xlu0 %2291, %v1958
  %v2293 = vpop.permute.xlu0 %2292
  %2296 = vset.pattern.permute.xlu0 0
  %2297 = vperm.xlu0 %2296, %v1959
  %v2298 = vpop.permute.xlu0 %2297
  %2301 = vset.pattern.permute.xlu0 0
  %2302 = vperm.xlu0 %2301, %v1960
  %v2303 = vpop.permute.xlu0 %2302
  %2306 = vset.pattern.permute.xlu0 0
  %2307 = vperm.xlu0 %2306, %v1961
  %v2308 = vpop.permute.xlu0 %2307
  %2311 = vset.pattern.permute.xlu0 0
  %2312 = vperm.xlu0 %2311, %v1962
  %v2313 = vpop.permute.xlu0 %2312
  %2316 = vset.pattern.permute.xlu0 0
  %2317 = vperm.xlu0 %2316, %v1963
  %v2318 = vpop.permute.xlu0 %2317
  %2321 = vset.pattern.permute.xlu0 0
  %2322 = vperm.xlu0 %2321, %v1964
  %v2323 = vpop.permute.xlu0 %2322
  %2326 = vset.pattern.permute.xlu0 0
  %2327 = vperm.xlu0 %2326, %v1965
  %v2328 = vpop.permute.xlu0 %2327
  %2331 = vset.pattern.permute.xlu0 0
  %2332 = vperm.xlu0 %2331, %v1966
  %v2333 = vpop.permute.xlu0 %2332
  %2336 = vset.pattern.permute.xlu0 0
  %2337 = vperm.xlu0 %2336, %v1967
  %v2338 = vpop.permute.xlu0 %2337
  %2341 = vset.pattern.permute.xlu0 0
  %2342 = vperm.xlu0 %2341, %v1968
  %v2343 = vpop.permute.xlu0 %2342
  %2346 = vset.pattern.permute.xlu0 0
  %2347 = vperm.xlu0 %2346, %v1969
  %v2348 = vpop.permute.xlu0 %2347
  %2351 = vset.pattern.permute.xlu0 0
  %2352 = vperm.xlu0 %2351, %v1970
  %v2353 = vpop.permute.xlu0 %2352
  %2356 = vset.pattern.permute.xlu0 0
  %2357 = vperm.xlu0 %2356, %v1971
  %v2358 = vpop.permute.xlu0 %2357
  %2361 = vset.pattern.permute.xlu0 0
  %2362 = vperm.xlu0 %2361, %v1972
  %v2363 = vpop.permute.xlu0 %2362
  %2366 = vset.pattern.permute.xlu0 0
  %2367 = vperm.xlu0 %2366, %v1973
  %v2368 = vpop.permute.xlu0 %2367
  %2371 = vset.pattern.permute.xlu0 0
  %2372 = vperm.xlu0 %2371, %v1974
  %v2373 = vpop.permute.xlu0 %2372
  %2376 = vset.pattern.permute.xlu0 0
  %2377 = vperm.xlu0 %2376, %v1975
  %v2378 = vpop.permute.xlu0 %2377
  %2381 = vset.pattern.permute.xlu0 0
  %2382 = vperm.xlu0 %2381, %v1976
  %v2383 = vpop.permute.xlu0 %2382
  %2386 = vset.pattern.permute.xlu0 0
  %2387 = vperm.xlu0 %2386, %v1977
  %v2388 = vpop.permute.xlu0 %2387
  %2391 = vset.pattern.permute.xlu0 0
  %2392 = vperm.xlu0 %2391, %v1978
  %v2393 = vpop.permute.xlu0 %2392
  %2396 = vset.pattern.permute.xlu0 0
  %2397 = vperm.xlu0 %2396, %v1979
  %v2398 = vpop.permute.xlu0 %2397
  %2401 = vset.pattern.permute.xlu0 0
  %2402 = vperm.xlu0 %2401, %v1980
  %v2403 = vpop.permute.xlu0 %2402
  %2406 = vset.pattern.permute.xlu0 0
  %2407 = vperm.xlu0 %2406, %v1981
  %v2408 = vpop.permute.xlu0 %2407
  %2411 = vset.pattern.permute.xlu0 0
  %2412 = vperm.xlu0 %2411, %v1982
  %v2413 = vpop.permute.xlu0 %2412
  %2416 = vset.pattern.permute.xlu0 0
  %2417 = vperm.xlu0 %2416, %v1983
  %v2418 = vpop.permute.xlu0 %2417
  %2421 = vset.pattern.permute.xlu0 0
  %2422 = vperm.xlu0 %2421, %v1984
  %v2423 = vpop.permute.xlu0 %2422
  %2426 = vset.pattern.permute.xlu0 0
  %2427 = vperm.xlu0 %2426, %v1985
  %v2428 = vpop.permute.xlu0 %2427
  %2431 = vset.pattern.permute.xlu0 0
  %2432 = vperm.xlu0 %2431, %v1986
  %v2433 = vpop.permute.xlu0 %2432
  %2436 = vset.pattern.permute.xlu0 0
  %2437 = vperm.xlu0 %2436, %v1987
  %v2438 = vpop.permute.xlu0 %2437
  %2441 = vset.pattern.permute.xlu0 0
  %2442 = vperm.xlu0 %2441, %v1988
  %v2443 = vpop.permute.xlu0 %2442
  %2446 = vset.pattern.permute.xlu0 0
  %2447 = vperm.xlu0 %2446, %v1989
  %v2448 = vpop.permute.xlu0 %2447
  %2451 = vset.pattern.permute.xlu0 0
  %2452 = vperm.xlu0 %2451, %v1990
  %v2453 = vpop.permute.xlu0 %2452
  %2456 = vset.pattern.permute.xlu0 0
  %2457 = vperm.xlu0 %2456, %v1991
  %v2458 = vpop.permute.xlu0 %2457
  %2461 = vset.pattern.permute.xlu0 0
  %2462 = vperm.xlu0 %2461, %v1992
  %v2463 = vpop.permute.xlu0 %2462
  %2466 = vset.pattern.permute.xlu0 0
  %2467 = vperm.xlu0 %2466, %v1993
  %v2468 = vpop.permute.xlu0 %2467
  %2471 = vset.pattern.permute.xlu0 0
  %2472 = vperm.xlu0 %2471, %v1994
  %v2473 = vpop.permute.xlu0 %2472
  %2476 = vset.pattern.permute.xlu0 0
  %2477 = vperm.xlu0 %2476, %v1995
  %v2478 = vpop.permute.xlu0 %2477
  %2481 = vset.pattern.permute.xlu0 0
  %2482 = vperm.xlu0 %2481, %v1996
  %v2483 = vpop.permute.xlu0 %2482
  %2486 = vset.pattern.permute.xlu0 0
  %2487 = vperm.xlu0 %2486, %v1997
  %v2488 = vpop.permute.xlu0 %2487
  %2491 = vset.pattern.permute.xlu0 0
  %2492 = vperm.xlu0 %2491, %v1998
  %v2493 = vpop.permute.xlu0 %2492
  %2496 = vset.pattern.permute.xlu0 0
  %2497 = vperm.xlu0 %2496, %v1999
  %v2498 = vpop.permute.xlu0 %2497
  %2501 = vset.pattern.permute.xlu0 0
  %2502 = vperm.xlu0 %2501, %v2000
  %v2503 = vpop.permute.xlu0 %2502
  %2506 = vset.pattern.permute.xlu0 0
  %2507 = vperm.xlu0 %2506, %v2001
  %v2508 = vpop.permute.xlu0 %2507
  %2511 = vset.pattern.permute.xlu0 0
  %2512 = vperm.xlu0 %2511, %v2002
  %v2513 = vpop.permute.xlu0 %2512
  %2516 = vset.pattern.permute.xlu0 0
  %2517 = vperm.xlu0 %2516, %v2003
  %v2518 = vpop.permute.xlu0 %2517
  %2521 = vset.pattern.permute.xlu0 0
  %2522 = vperm.xlu0 %2521, %v2004
  %v2523 = vpop.permute.xlu0 %2522
  %2526 = vset.pattern.permute.xlu0 0
  %2527 = vperm.xlu0 %2526, %v2005
  %v2528 = vpop.permute.xlu0 %2527
  %2531 = vset.pattern.permute.xlu0 0
  %2532 = vperm.xlu0 %2531, %v2006
  %v2533 = vpop.permute.xlu0 %2532
  %2536 = vset.pattern.permute.xlu0 0
  %2537 = vperm.xlu0 %2536, %v2007
  %v2538 = vpop.permute.xlu0 %2537
  %2541 = vset.pattern.permute.xlu0 0
  %2542 = vperm.xlu0 %2541, %v2008
  %v2543 = vpop.permute.xlu0 %2542
  %2546 = vset.pattern.permute.xlu0 0
  %2547 = vperm.xlu0 %2546, %v2009
  %v2548 = vpop.permute.xlu0 %2547
  %2551 = vset.pattern.permute.xlu0 0
  %2552 = vperm.xlu0 %2551, %v2010
  %v2553 = vpop.permute.xlu0 %2552
  %2556 = vset.pattern.permute.xlu0 0
  %2557 = vperm.xlu0 %2556, %v2011
  %v2558 = vpop.permute.xlu0 %2557
  %2561 = vset.pattern.permute.xlu0 0
  %2562 = vperm.xlu0 %2561, %v2012
  %v2563 = vpop.permute.xlu0 %2562
  %2566 = vset.pattern.permute.xlu0 0
  %2567 = vperm.xlu0 %2566, %v2013
  %v2568 = vpop.permute.xlu0 %2567
  %2571 = vset.pattern.permute.xlu0 0
  %2572 = vperm.xlu0 %2571, %v2014
  %v2573 = vpop.permute.xlu0 %2572
  %v2575 = vmul.f32 %v14, %v2178
  %v2576 = vmul.f32 %v15, %v2183
  %v2577 = vmul.f32 %v16, %v2188
  %v2578 = vmul.f32 %v17, %v2193
  %v2579 = vmul.f32 %v18, %v2198
  %v2580 = vmul.f32 %v19, %v2203
  %v2581 = vmul.f32 %v20, %v2208
  %v2582 = vmul.f32 %v21, %v2213
  %v2583 = vmul.f32 %v22, %v2218
  %v2584 = vmul.f32 %v23, %v2223
  %v2585 = vmul.f32 %v24, %v2228
  %v2586 = vmul.f32 %v25, %v2233
  %v2587 = vmul.f32 %v26, %v2238
  %v2588 = vmul.f32 %v27, %v2243
  %v2589 = vmul.f32 %v28, %v2248
  %v2590 = vmul.f32 %v29, %v2253
  %v2591 = vmul.f32 %v30, %v2258
  %v2592 = vmul.f32 %v31, %v2263
  %v2593 = vmul.f32 %v32, %v2268
  %v2594 = vmul.f32 %v33, %v2273
  %v2595 = vmul.f32 %v34, %v2278
  %v2596 = vmul.f32 %v35, %v2283
  %v2597 = vmul.f32 %v36, %v2288
  %v2598 = vmul.f32 %v37, %v2293
  %v2599 = vmul.f32 %v38, %v2298
  %v2600 = vmul.f32 %v39, %v2303
  %v2601 = vmul.f32 %v40, %v2308
  %v2602 = vmul.f32 %v41, %v2313
  %v2603 = vmul.f32 %v42, %v2318
  %v2604 = vmul.f32 %v43, %v2323
  %v2605 = vmul.f32 %v44, %v2328
  %v2606 = vmul.f32 %v45, %v2333
  %v2607 = vmul.f32 %v46, %v2338
  %v2608 = vmul.f32 %v47, %v2343
  %v2609 = vmul.f32 %v48, %v2348
  %v2610 = vmul.f32 %v49, %v2353
  %v2611 = vmul.f32 %v50, %v2358
  %v2612 = vmul.f32 %v51, %v2363
  %v2613 = vmul.f32 %v52, %v2368
  %v2614 = vmul.f32 %v53, %v2373
  %v2615 = vmul.f32 %v54, %v2378
  %v2616 = vmul.f32 %v55, %v2383
  %v2617 = vmul.f32 %v56, %v2388
  %v2618 = vmul.f32 %v57, %v2393
  %v2619 = vmul.f32 %v58, %v2398
  %v2620 = vmul.f32 %v59, %v2403
  %v2621 = vmul.f32 %v60, %v2408
  %v2622 = vmul.f32 %v61, %v2413
  %v2623 = vmul.f32 %v62, %v2418
  %v2624 = vmul.f32 %v63, %v2423
  %v2625 = vmul.f32 %v64, %v2428
  %v2626 = vmul.f32 %v65, %v2433
  %v2627 = vmul.f32 %v66, %v2438
  %v2628 = vmul.f32 %v67, %v2443
  %v2629 = vmul.f32 %v68, %v2448
  %v2630 = vmul.f32 %v69, %v2453
  %v2631 = vmul.f32 %v70, %v2458
  %v2632 = vmul.f32 %v71, %v2463
  %v2633 = vmul.f32 %v72, %v2468
  %v2634 = vmul.f32 %v73, %v2473
  %v2635 = vmul.f32 %v74, %v2478
  %v2636 = vmul.f32 %v75, %v2483
  %v2637 = vmul.f32 %v76, %v2488
  %v2638 = vmul.f32 %v77, %v2493
  %v2639 = vmul.f32 %v78, %v2498
  %v2640 = vmul.f32 %v79, %v2503
  %v2641 = vmul.f32 %v80, %v2508
  %v2642 = vmul.f32 %v81, %v2513
  %v2643 = vmul.f32 %v82, %v2518
  %v2644 = vmul.f32 %v83, %v2523
  %v2645 = vmul.f32 %v84, %v2528
  %v2646 = vmul.f32 %v85, %v2533
  %v2647 = vmul.f32 %v86, %v2538
  %v2648 = vmul.f32 %v87, %v2543
  %v2649 = vmul.f32 %v88, %v2548
  %v2650 = vmul.f32 %v89, %v2553
  %v2651 = vmul.f32 %v90, %v2558
  %v2652 = vmul.f32 %v91, %v2563
  %v2653 = vmul.f32 %v92, %v2568
  %v2654 = vmul.f32 %v93, %v2573
  %2656 = vset.pattern.permute.xlu0 0
  %2657 = vperm.xlu0 %2656, %v2095
  %v2658 = vpop.permute.xlu0 %2657
  %2661 = vset.pattern.permute.xlu0 0
  %2662 = vperm.xlu0 %2661, %v2096
  %v2663 = vpop.permute.xlu0 %2662
  %2666 = vset.pattern.permute.xlu0 0
  %2667 = vperm.xlu0 %2666, %v2097
  %v2668 = vpop.permute.xlu0 %2667
  %2671 = vset.pattern.permute.xlu0 0
  %2672 = vperm.xlu0 %2671, %v2098
  %v2673 = vpop.permute.xlu0 %2672
  %2676 = vset.pattern.permute.xlu0 0
  %2677 = vperm.xlu0 %2676, %v2099
  %v2678 = vpop.permute.xlu0 %2677
  %2681 = vset.pattern.permute.xlu0 0
  %2682 = vperm.xlu0 %2681, %v2100
  %v2683 = vpop.permute.xlu0 %2682
  %2686 = vset.pattern.permute.xlu0 0
  %2687 = vperm.xlu0 %2686, %v2101
  %v2688 = vpop.permute.xlu0 %2687
  %2691 = vset.pattern.permute.xlu0 0
  %2692 = vperm.xlu0 %2691, %v2102
  %v2693 = vpop.permute.xlu0 %2692
  %2696 = vset.pattern.permute.xlu0 0
  %2697 = vperm.xlu0 %2696, %v2103
  %v2698 = vpop.permute.xlu0 %2697
  %2701 = vset.pattern.permute.xlu0 0
  %2702 = vperm.xlu0 %2701, %v2104
  %v2703 = vpop.permute.xlu0 %2702
  %2706 = vset.pattern.permute.xlu0 0
  %2707 = vperm.xlu0 %2706, %v2105
  %v2708 = vpop.permute.xlu0 %2707
  %2711 = vset.pattern.permute.xlu0 0
  %2712 = vperm.xlu0 %2711, %v2106
  %v2713 = vpop.permute.xlu0 %2712
  %2716 = vset.pattern.permute.xlu0 0
  %2717 = vperm.xlu0 %2716, %v2107
  %v2718 = vpop.permute.xlu0 %2717
  %2721 = vset.pattern.permute.xlu0 0
  %2722 = vperm.xlu0 %2721, %v2108
  %v2723 = vpop.permute.xlu0 %2722
  %2726 = vset.pattern.permute.xlu0 0
  %2727 = vperm.xlu0 %2726, %v2109
  %v2728 = vpop.permute.xlu0 %2727
  %2731 = vset.pattern.permute.xlu0 0
  %2732 = vperm.xlu0 %2731, %v2110
  %v2733 = vpop.permute.xlu0 %2732
  %2736 = vset.pattern.permute.xlu0 0
  %2737 = vperm.xlu0 %2736, %v2111
  %v2738 = vpop.permute.xlu0 %2737
  %2741 = vset.pattern.permute.xlu0 0
  %2742 = vperm.xlu0 %2741, %v2112
  %v2743 = vpop.permute.xlu0 %2742
  %2746 = vset.pattern.permute.xlu0 0
  %2747 = vperm.xlu0 %2746, %v2113
  %v2748 = vpop.permute.xlu0 %2747
  %2751 = vset.pattern.permute.xlu0 0
  %2752 = vperm.xlu0 %2751, %v2114
  %v2753 = vpop.permute.xlu0 %2752
  %2756 = vset.pattern.permute.xlu0 0
  %2757 = vperm.xlu0 %2756, %v2115
  %v2758 = vpop.permute.xlu0 %2757
  %2761 = vset.pattern.permute.xlu0 0
  %2762 = vperm.xlu0 %2761, %v2116
  %v2763 = vpop.permute.xlu0 %2762
  %2766 = vset.pattern.permute.xlu0 0
  %2767 = vperm.xlu0 %2766, %v2117
  %v2768 = vpop.permute.xlu0 %2767
  %2771 = vset.pattern.permute.xlu0 0
  %2772 = vperm.xlu0 %2771, %v2118
  %v2773 = vpop.permute.xlu0 %2772
  %2776 = vset.pattern.permute.xlu0 0
  %2777 = vperm.xlu0 %2776, %v2119
  %v2778 = vpop.permute.xlu0 %2777
  %2781 = vset.pattern.permute.xlu0 0
  %2782 = vperm.xlu0 %2781, %v2120
  %v2783 = vpop.permute.xlu0 %2782
  %2786 = vset.pattern.permute.xlu0 0
  %2787 = vperm.xlu0 %2786, %v2121
  %v2788 = vpop.permute.xlu0 %2787
  %2791 = vset.pattern.permute.xlu0 0
  %2792 = vperm.xlu0 %2791, %v2122
  %v2793 = vpop.permute.xlu0 %2792
  %2796 = vset.pattern.permute.xlu0 0
  %2797 = vperm.xlu0 %2796, %v2123
  %v2798 = vpop.permute.xlu0 %2797
  %2801 = vset.pattern.permute.xlu0 0
  %2802 = vperm.xlu0 %2801, %v2124
  %v2803 = vpop.permute.xlu0 %2802
  %2806 = vset.pattern.permute.xlu0 0
  %2807 = vperm.xlu0 %2806, %v2125
  %v2808 = vpop.permute.xlu0 %2807
  %2811 = vset.pattern.permute.xlu0 0
  %2812 = vperm.xlu0 %2811, %v2126
  %v2813 = vpop.permute.xlu0 %2812
  %2816 = vset.pattern.permute.xlu0 0
  %2817 = vperm.xlu0 %2816, %v2127
  %v2818 = vpop.permute.xlu0 %2817
  %2821 = vset.pattern.permute.xlu0 0
  %2822 = vperm.xlu0 %2821, %v2128
  %v2823 = vpop.permute.xlu0 %2822
  %2826 = vset.pattern.permute.xlu0 0
  %2827 = vperm.xlu0 %2826, %v2129
  %v2828 = vpop.permute.xlu0 %2827
  %2831 = vset.pattern.permute.xlu0 0
  %2832 = vperm.xlu0 %2831, %v2130
  %v2833 = vpop.permute.xlu0 %2832
  %2836 = vset.pattern.permute.xlu0 0
  %2837 = vperm.xlu0 %2836, %v2131
  %v2838 = vpop.permute.xlu0 %2837
  %2841 = vset.pattern.permute.xlu0 0
  %2842 = vperm.xlu0 %2841, %v2132
  %v2843 = vpop.permute.xlu0 %2842
  %2846 = vset.pattern.permute.xlu0 0
  %2847 = vperm.xlu0 %2846, %v2133
  %v2848 = vpop.permute.xlu0 %2847
  %2851 = vset.pattern.permute.xlu0 0
  %2852 = vperm.xlu0 %2851, %v2134
  %v2853 = vpop.permute.xlu0 %2852
  %2856 = vset.pattern.permute.xlu0 0
  %2857 = vperm.xlu0 %2856, %v2135
  %v2858 = vpop.permute.xlu0 %2857
  %2861 = vset.pattern.permute.xlu0 0
  %2862 = vperm.xlu0 %2861, %v2136
  %v2863 = vpop.permute.xlu0 %2862
  %2866 = vset.pattern.permute.xlu0 0
  %2867 = vperm.xlu0 %2866, %v2137
  %v2868 = vpop.permute.xlu0 %2867
  %2871 = vset.pattern.permute.xlu0 0
  %2872 = vperm.xlu0 %2871, %v2138
  %v2873 = vpop.permute.xlu0 %2872
  %2876 = vset.pattern.permute.xlu0 0
  %2877 = vperm.xlu0 %2876, %v2139
  %v2878 = vpop.permute.xlu0 %2877
  %2881 = vset.pattern.permute.xlu0 0
  %2882 = vperm.xlu0 %2881, %v2140
  %v2883 = vpop.permute.xlu0 %2882
  %2886 = vset.pattern.permute.xlu0 0
  %2887 = vperm.xlu0 %2886, %v2141
  %v2888 = vpop.permute.xlu0 %2887
  %2891 = vset.pattern.permute.xlu0 0
  %2892 = vperm.xlu0 %2891, %v2142
  %v2893 = vpop.permute.xlu0 %2892
  %2896 = vset.pattern.permute.xlu0 0
  %2897 = vperm.xlu0 %2896, %v2143
  %v2898 = vpop.permute.xlu0 %2897
  %2901 = vset.pattern.permute.xlu0 0
  %2902 = vperm.xlu0 %2901, %v2144
  %v2903 = vpop.permute.xlu0 %2902
  %2906 = vset.pattern.permute.xlu0 0
  %2907 = vperm.xlu0 %2906, %v2145
  %v2908 = vpop.permute.xlu0 %2907
  %2911 = vset.pattern.permute.xlu0 0
  %2912 = vperm.xlu0 %2911, %v2146
  %v2913 = vpop.permute.xlu0 %2912
  %2916 = vset.pattern.permute.xlu0 0
  %2917 = vperm.xlu0 %2916, %v2147
  %v2918 = vpop.permute.xlu0 %2917
  %2921 = vset.pattern.permute.xlu0 0
  %2922 = vperm.xlu0 %2921, %v2148
  %v2923 = vpop.permute.xlu0 %2922
  %2926 = vset.pattern.permute.xlu0 0
  %2927 = vperm.xlu0 %2926, %v2149
  %v2928 = vpop.permute.xlu0 %2927
  %2931 = vset.pattern.permute.xlu0 0
  %2932 = vperm.xlu0 %2931, %v2150
  %v2933 = vpop.permute.xlu0 %2932
  %2936 = vset.pattern.permute.xlu0 0
  %2937 = vperm.xlu0 %2936, %v2151
  %v2938 = vpop.permute.xlu0 %2937
  %2941 = vset.pattern.permute.xlu0 0
  %2942 = vperm.xlu0 %2941, %v2152
  %v2943 = vpop.permute.xlu0 %2942
  %2946 = vset.pattern.permute.xlu0 0
  %2947 = vperm.xlu0 %2946, %v2153
  %v2948 = vpop.permute.xlu0 %2947
  %2951 = vset.pattern.permute.xlu0 0
  %2952 = vperm.xlu0 %2951, %v2154
  %v2953 = vpop.permute.xlu0 %2952
  %2956 = vset.pattern.permute.xlu0 0
  %2957 = vperm.xlu0 %2956, %v2155
  %v2958 = vpop.permute.xlu0 %2957
  %2961 = vset.pattern.permute.xlu0 0
  %2962 = vperm.xlu0 %2961, %v2156
  %v2963 = vpop.permute.xlu0 %2962
  %2966 = vset.pattern.permute.xlu0 0
  %2967 = vperm.xlu0 %2966, %v2157
  %v2968 = vpop.permute.xlu0 %2967
  %2971 = vset.pattern.permute.xlu0 0
  %2972 = vperm.xlu0 %2971, %v2158
  %v2973 = vpop.permute.xlu0 %2972
  %2976 = vset.pattern.permute.xlu0 0
  %2977 = vperm.xlu0 %2976, %v2159
  %v2978 = vpop.permute.xlu0 %2977
  %2981 = vset.pattern.permute.xlu0 0
  %2982 = vperm.xlu0 %2981, %v2160
  %v2983 = vpop.permute.xlu0 %2982
  %2986 = vset.pattern.permute.xlu0 0
  %2987 = vperm.xlu0 %2986, %v2161
  %v2988 = vpop.permute.xlu0 %2987
  %2991 = vset.pattern.permute.xlu0 0
  %2992 = vperm.xlu0 %2991, %v2162
  %v2993 = vpop.permute.xlu0 %2992
  %2996 = vset.pattern.permute.xlu0 0
  %2997 = vperm.xlu0 %2996, %v2163
  %v2998 = vpop.permute.xlu0 %2997
  %3001 = vset.pattern.permute.xlu0 0
  %3002 = vperm.xlu0 %3001, %v2164
  %v3003 = vpop.permute.xlu0 %3002
  %3006 = vset.pattern.permute.xlu0 0
  %3007 = vperm.xlu0 %3006, %v2165
  %v3008 = vpop.permute.xlu0 %3007
  %3011 = vset.pattern.permute.xlu0 0
  %3012 = vperm.xlu0 %3011, %v2166
  %v3013 = vpop.permute.xlu0 %3012
  %3016 = vset.pattern.permute.xlu0 0
  %3017 = vperm.xlu0 %3016, %v2167
  %v3018 = vpop.permute.xlu0 %3017
  %3021 = vset.pattern.permute.xlu0 0
  %3022 = vperm.xlu0 %3021, %v2168
  %v3023 = vpop.permute.xlu0 %3022
  %3026 = vset.pattern.permute.xlu0 0
  %3027 = vperm.xlu0 %3026, %v2169
  %v3028 = vpop.permute.xlu0 %3027
  %3031 = vset.pattern.permute.xlu0 0
  %3032 = vperm.xlu0 %3031, %v2170
  %v3033 = vpop.permute.xlu0 %3032
  %3036 = vset.pattern.permute.xlu0 0
  %3037 = vperm.xlu0 %3036, %v2171
  %v3038 = vpop.permute.xlu0 %3037
  %3041 = vset.pattern.permute.xlu0 0
  %3042 = vperm.xlu0 %3041, %v2172
  %v3043 = vpop.permute.xlu0 %3042
  %3046 = vset.pattern.permute.xlu0 0
  %3047 = vperm.xlu0 %3046, %v2173
  %v3048 = vpop.permute.xlu0 %3047
  %3051 = vset.pattern.permute.xlu0 0
  %3052 = vperm.xlu0 %3051, %v2174
  %v3053 = vpop.permute.xlu0 %3052
  %v3055 = vadd.f32 %v2575, %v2658
  %v3056 = vadd.f32 %v2576, %v2663
  %v3057 = vadd.f32 %v2577, %v2668
  %v3058 = vadd.f32 %v2578, %v2673
  %v3059 = vadd.f32 %v2579, %v2678
  %v3060 = vadd.f32 %v2580, %v2683
  %v3061 = vadd.f32 %v2581, %v2688
  %v3062 = vadd.f32 %v2582, %v2693
  %v3063 = vadd.f32 %v2583, %v2698
  %v3064 = vadd.f32 %v2584, %v2703
  %v3065 = vadd.f32 %v2585, %v2708
  %v3066 = vadd.f32 %v2586, %v2713
  %v3067 = vadd.f32 %v2587, %v2718
  %v3068 = vadd.f32 %v2588, %v2723
  %v3069 = vadd.f32 %v2589, %v2728
  %v3070 = vadd.f32 %v2590, %v2733
  %v3071 = vadd.f32 %v2591, %v2738
  %v3072 = vadd.f32 %v2592, %v2743
  %v3073 = vadd.f32 %v2593, %v2748
  %v3074 = vadd.f32 %v2594, %v2753
  %v3075 = vadd.f32 %v2595, %v2758
  %v3076 = vadd.f32 %v2596, %v2763
  %v3077 = vadd.f32 %v2597, %v2768
  %v3078 = vadd.f32 %v2598, %v2773
  %v3079 = vadd.f32 %v2599, %v2778
  %v3080 = vadd.f32 %v2600, %v2783
  %v3081 = vadd.f32 %v2601, %v2788
  %v3082 = vadd.f32 %v2602, %v2793
  %v3083 = vadd.f32 %v2603, %v2798
  %v3084 = vadd.f32 %v2604, %v2803
  %v3085 = vadd.f32 %v2605, %v2808
  %v3086 = vadd.f32 %v2606, %v2813
  %v3087 = vadd.f32 %v2607, %v2818
  %v3088 = vadd.f32 %v2608, %v2823
  %v3089 = vadd.f32 %v2609, %v2828
  %v3090 = vadd.f32 %v2610, %v2833
  %v3091 = vadd.f32 %v2611, %v2838
  %v3092 = vadd.f32 %v2612, %v2843
  %v3093 = vadd.f32 %v2613, %v2848
  %v3094 = vadd.f32 %v2614, %v2853
  %v3095 = vadd.f32 %v2615, %v2858
  %v3096 = vadd.f32 %v2616, %v2863
  %v3097 = vadd.f32 %v2617, %v2868
  %v3098 = vadd.f32 %v2618, %v2873
  %v3099 = vadd.f32 %v2619, %v2878
  %v3100 = vadd.f32 %v2620, %v2883
  %v3101 = vadd.f32 %v2621, %v2888
  %v3102 = vadd.f32 %v2622, %v2893
  %v3103 = vadd.f32 %v2623, %v2898
  %v3104 = vadd.f32 %v2624, %v2903
  %v3105 = vadd.f32 %v2625, %v2908
  %v3106 = vadd.f32 %v2626, %v2913
  %v3107 = vadd.f32 %v2627, %v2918
  %v3108 = vadd.f32 %v2628, %v2923
  %v3109 = vadd.f32 %v2629, %v2928
  %v3110 = vadd.f32 %v2630, %v2933
  %v3111 = vadd.f32 %v2631, %v2938
  %v3112 = vadd.f32 %v2632, %v2943
  %v3113 = vadd.f32 %v2633, %v2948
  %v3114 = vadd.f32 %v2634, %v2953
  %v3115 = vadd.f32 %v2635, %v2958
  %v3116 = vadd.f32 %v2636, %v2963
  %v3117 = vadd.f32 %v2637, %v2968
  %v3118 = vadd.f32 %v2638, %v2973
  %v3119 = vadd.f32 %v2639, %v2978
  %v3120 = vadd.f32 %v2640, %v2983
  %v3121 = vadd.f32 %v2641, %v2988
  %v3122 = vadd.f32 %v2642, %v2993
  %v3123 = vadd.f32 %v2643, %v2998
  %v3124 = vadd.f32 %v2644, %v3003
  %v3125 = vadd.f32 %v2645, %v3008
  %v3126 = vadd.f32 %v2646, %v3013
  %v3127 = vadd.f32 %v2647, %v3018
  %v3128 = vadd.f32 %v2648, %v3023
  %v3129 = vadd.f32 %v2649, %v3028
  %v3130 = vadd.f32 %v2650, %v3033
  %v3131 = vadd.f32 %v2651, %v3038
  %v3132 = vadd.f32 %v2652, %v3043
  %v3133 = vadd.f32 %v2653, %v3048
  %v3134 = vadd.f32 %v2654, %v3053
  %3135 = vst.msk [vmem:[%s3] sm:$0xff] %vm94, %v3055
  %3136 = vst.msk [vmem:[%s3 + $0x8] sm:$0xff] %vm94, %v3056
  %3137 = vst.msk [vmem:[%s3 + $0x10] sm:$0xff] %vm94, %v3057
  %3138 = vst.msk [vmem:[%s3 + $0x18] sm:$0xff] %vm94, %v3058
  %3139 = vst.msk [vmem:[%s3 + $0x20] sm:$0xff] %vm94, %v3059
  %3140 = vst.msk [vmem:[%s3 + $0x28] sm:$0xff] %vm94, %v3060
  %3141 = vst.msk [vmem:[%s3 + $0x30] sm:$0xff] %vm94, %v3061
  %3142 = vst.msk [vmem:[%s3 + $0x38] sm:$0xff] %vm94, %v3062
  %3143 = vst.msk [vmem:[%s3 + $0x40] sm:$0xff] %vm94, %v3063
  %3144 = vst.msk [vmem:[%s3 + $0x48] sm:$0xff] %vm94, %v3064
  %3145 = vst.msk [vmem:[%s3 + $0x50] sm:$0xff] %vm94, %v3065
  %3146 = vst.msk [vmem:[%s3 + $0x58] sm:$0xff] %vm94, %v3066
  %3147 = vst.msk [vmem:[%s3 + $0x60] sm:$0xff] %vm94, %v3067
  %3148 = vst.msk [vmem:[%s3 + $0x68] sm:$0xff] %vm94, %v3068
  %3149 = vst.msk [vmem:[%s3 + $0x70] sm:$0xff] %vm94, %v3069
  %3150 = vst.msk [vmem:[%s3 + $0x78] sm:$0xff] %vm94, %v3070
  %3151 = vst.msk [vmem:[%s3 + $0x80] sm:$0xff] %vm94, %v3071
  %3152 = vst.msk [vmem:[%s3 + $0x88] sm:$0xff] %vm94, %v3072
  %3153 = vst.msk [vmem:[%s3 + $0x90] sm:$0xff] %vm94, %v3073
  %3154 = vst.msk [vmem:[%s3 + $0x98] sm:$0xff] %vm94, %v3074
  %3155 = vst.msk [vmem:[%s3 + $0xa0] sm:$0xff] %vm94, %v3075
  %3156 = vst.msk [vmem:[%s3 + $0xa8] sm:$0xff] %vm94, %v3076
  %3157 = vst.msk [vmem:[%s3 + $0xb0] sm:$0xff] %vm94, %v3077
  %3158 = vst.msk [vmem:[%s3 + $0xb8] sm:$0xff] %vm94, %v3078
  %3159 = vst.msk [vmem:[%s3 + $0xc0] sm:$0xff] %vm94, %v3079
  %3160 = vst.msk [vmem:[%s3 + $0xc8] sm:$0xff] %vm94, %v3080
  %3161 = vst.msk [vmem:[%s3 + $0xd0] sm:$0xff] %vm94, %v3081
  %3162 = vst.msk [vmem:[%s3 + $0xd8] sm:$0xff] %vm94, %v3082
  %3163 = vst.msk [vmem:[%s3 + $0xe0] sm:$0xff] %vm94, %v3083
  %3164 = vst.msk [vmem:[%s3 + $0xe8] sm:$0xff] %vm94, %v3084
  %3165 = vst.msk [vmem:[%s3 + $0xf0] sm:$0xff] %vm94, %v3085
  %3166 = vst.msk [vmem:[%s3 + $0xf8] sm:$0xff] %vm94, %v3086
  %3167 = vst.msk [vmem:[%s3 + $0x100] sm:$0xff] %vm94, %v3087
  %3168 = vst.msk [vmem:[%s3 + $0x108] sm:$0xff] %vm94, %v3088
  %3169 = vst.msk [vmem:[%s3 + $0x110] sm:$0xff] %vm94, %v3089
  %3170 = vst.msk [vmem:[%s3 + $0x118] sm:$0xff] %vm94, %v3090
  %3171 = vst.msk [vmem:[%s3 + $0x120] sm:$0xff] %vm94, %v3091
  %3172 = vst.msk [vmem:[%s3 + $0x128] sm:$0xff] %vm94, %v3092
  %3173 = vst.msk [vmem:[%s3 + $0x130] sm:$0xff] %vm94, %v3093
  %3174 = vst.msk [vmem:[%s3 + $0x138] sm:$0xff] %vm94, %v3094
  %3175 = vst.msk [vmem:[%s3 + $0x140] sm:$0xff] %vm94, %v3095
  %3176 = vst.msk [vmem:[%s3 + $0x148] sm:$0xff] %vm94, %v3096
  %3177 = vst.msk [vmem:[%s3 + $0x150] sm:$0xff] %vm94, %v3097
  %3178 = vst.msk [vmem:[%s3 + $0x158] sm:$0xff] %vm94, %v3098
  %3179 = vst.msk [vmem:[%s3 + $0x160] sm:$0xff] %vm94, %v3099
  %3180 = vst.msk [vmem:[%s3 + $0x168] sm:$0xff] %vm94, %v3100
  %3181 = vst.msk [vmem:[%s3 + $0x170] sm:$0xff] %vm94, %v3101
  %3182 = vst.msk [vmem:[%s3 + $0x178] sm:$0xff] %vm94, %v3102
  %3183 = vst.msk [vmem:[%s3 + $0x180] sm:$0xff] %vm94, %v3103
  %3184 = vst.msk [vmem:[%s3 + $0x188] sm:$0xff] %vm94, %v3104
  %3185 = vst.msk [vmem:[%s3 + $0x190] sm:$0xff] %vm94, %v3105
  %3186 = vst.msk [vmem:[%s3 + $0x198] sm:$0xff] %vm94, %v3106
  %3187 = vst.msk [vmem:[%s3 + $0x1a0] sm:$0xff] %vm94, %v3107
  %3188 = vst.msk [vmem:[%s3 + $0x1a8] sm:$0xff] %vm94, %v3108
  %3189 = vst.msk [vmem:[%s3 + $0x1b0] sm:$0xff] %vm94, %v3109
  %3190 = vst.msk [vmem:[%s3 + $0x1b8] sm:$0xff] %vm94, %v3110
  %3191 = vst.msk [vmem:[%s3 + $0x1c0] sm:$0xff] %vm94, %v3111
  %3192 = vst.msk [vmem:[%s3 + $0x1c8] sm:$0xff] %vm94, %v3112
  %3193 = vst.msk [vmem:[%s3 + $0x1d0] sm:$0xff] %vm94, %v3113
  %3194 = vst.msk [vmem:[%s3 + $0x1d8] sm:$0xff] %vm94, %v3114
  %3195 = vst.msk [vmem:[%s3 + $0x1e0] sm:$0xff] %vm94, %v3115
  %3196 = vst.msk [vmem:[%s3 + $0x1e8] sm:$0xff] %vm94, %v3116
  %3197 = vst.msk [vmem:[%s3 + $0x1f0] sm:$0xff] %vm94, %v3117
  %3198 = vst.msk [vmem:[%s3 + $0x1f8] sm:$0xff] %vm94, %v3118
  %3199 = vst.msk [vmem:[%s3 + $0x200] sm:$0xff] %vm94, %v3119
  %3200 = vst.msk [vmem:[%s3 + $0x208] sm:$0xff] %vm94, %v3120
  %3201 = vst.msk [vmem:[%s3 + $0x210] sm:$0xff] %vm94, %v3121
  %3202 = vst.msk [vmem:[%s3 + $0x218] sm:$0xff] %vm94, %v3122
  %3203 = vst.msk [vmem:[%s3 + $0x220] sm:$0xff] %vm94, %v3123
  %3204 = vst.msk [vmem:[%s3 + $0x228] sm:$0xff] %vm94, %v3124
  %3205 = vst.msk [vmem:[%s3 + $0x230] sm:$0xff] %vm94, %v3125
  %3206 = vst.msk [vmem:[%s3 + $0x238] sm:$0xff] %vm94, %v3126
  %3207 = vst.msk [vmem:[%s3 + $0x240] sm:$0xff] %vm94, %v3127
  %3208 = vst.msk [vmem:[%s3 + $0x248] sm:$0xff] %vm94, %v3128
  %3209 = vst.msk [vmem:[%s3 + $0x250] sm:$0xff] %vm94, %v3129
  %3210 = vst.msk [vmem:[%s3 + $0x258] sm:$0xff] %vm94, %v3130
  %3211 = vst.msk [vmem:[%s3 + $0x260] sm:$0xff] %vm94, %v3131
  %3212 = vst.msk [vmem:[%s3 + $0x268] sm:$0xff] %vm94, %v3132
  %3213 = vst.msk [vmem:[%s3 + $0x270] sm:$0xff] %vm94, %v3133
  %3214 = vst.msk [vmem:[%s3 + $0x278] sm:$0xff] %vm94, %v3134
  // Predicated region
  $region14: #{tpu_custom_call.1} parent=0 // pred_check
    _
  $region15: #{tpu_custom_call.1} parent=0 // pred_check_branch
    %3216 = sbr.rel (0) target = $region17
  $region16: #{tpu_custom_call.1} parent=0 // pred_region
    _
  $region17: #{tpu_custom_call.1} parent=0 // pred_fallthru
    _
  // Predicated region
  $region18: #{tpu_custom_call.1} parent=0 // pred_check
    _
  $region19: #{tpu_custom_call.1} parent=0 // pred_check_branch
    %3218 = sbr.rel (0) target = $region21
  $region20: #{tpu_custom_call.1} parent=0 // pred_region
    _
  $region21: #{tpu_custom_call.1} parent=0 // pred_fallthru
    _

</llo_original>
